<compile_context>
chip_gen: v6e
topology: v6e:2x2x1
jax: 0.10.0
libtpu: 0.0.40
codegen_flags: <defaults>
</compile_context>

<pallas_src>
import functools

import jax
import jax.numpy as jnp
from jax.experimental import pallas as pl
from jax.experimental.pallas import tpu as pltpu


# ----------------------------------------------------------------------------
# Pass 1: gating + review-level co-attention + gumbel-hard selection indices
# ----------------------------------------------------------------------------

def select_kernel(ui_sum_ref,                        # (1, 2R, D)  u|i review sums
                  gum_u_ref, gum_i_ref,              # (1, R, P), (1, P, R) gumbel noise
                  g_w12_ref, g_b2_ref, g_bg_ref,     # (D, 2D), (1, D), (1, D)
                  r_w_ref, r_b_ref, r_m_ref,         # (D, D), (1, D), (D, D)
                  o_ref,                             # (1, 8, 128) int32 indices
                  *, R, D, P):
    dot_t = functools.partial(
        jax.lax.dot_general,
        dimension_numbers=(((1,), (1,)), ((), ())),
        preferred_element_type=jnp.float32)

    # ------------------ GatingMachine (u/i fused, W1|W2 fused) ---------------
    x_g = ui_sum_ref[0]                                          # (2R, D)
    h_g = jnp.dot(x_g, g_w12_ref[...],
                  preferred_element_type=jnp.float32)            # (2R, 2D)
    gated = (jax.nn.sigmoid(h_g[:, :D])
             + g_bg_ref[...] * jnp.tanh(h_g[:, D:] + g_b2_ref[...]))  # (2R, D)

    # ---- review-level co-attention: loop-invariant, computed ONCE (hoisted) -
    h_r = jnp.maximum(
        jnp.dot(gated, r_w_ref[...], preferred_element_type=jnp.float32)
        + r_b_ref[...], 0.0)                                     # (2R, D)
    hu = jnp.dot(h_r[:R], r_m_ref[...],
                 preferred_element_type=jnp.float32)             # (R, D)  u_outs @ M
    hi = h_r[R:]                                                 # (R, D)
    s = dot_t(hu, hi)                                            # (R, R)  s[u, i]
    logit_u = jnp.max(s, axis=1, keepdims=True)                  # (R, 1) user logits
    logit_i = jnp.max(s, axis=0, keepdims=True)                  # (1, R) item logits

    gum_u = gum_u_ref[0]                                         # (R, P)
    gum_i = gum_i_ref[0]                                         # (P, R)
    iota_col = jax.lax.broadcasted_iota(jnp.int32, (R, 1), 0)
    iota_row = jax.lax.broadcasted_iota(jnp.int32, (1, R), 1)
    lanes = jax.lax.broadcasted_iota(jnp.int32, (8, 128), 1)

    def argmax_first(z, iota, axis):
        # hard gumbel-softmax forward value == one-hot(argmax(logits + g))
        m = jnp.max(z, axis=axis, keepdims=True)                 # (1, 1)
        cand = jnp.where(z >= m, iota, R)
        return jnp.min(cand, axis=axis, keepdims=True)           # (1, 1) first tie

    vec = jnp.zeros((8, 128), jnp.int32)
    for p in range(P):                                           # only noise differs
        z_u = logit_u + gum_u[:, p:p + 1]                        # (R, 1)
        z_i = logit_i + gum_i[p:p + 1, :]                        # (1, R)
        idx_u = argmax_first(z_u, iota_col, 0)
        idx_i = argmax_first(z_i, iota_row, 1)
        vec = jnp.where(lanes == p, jnp.broadcast_to(idx_u, (8, 128)), vec)
        vec = jnp.where(lanes == (P + p), jnp.broadcast_to(idx_i, (8, 128)), vec)

    o_ref[...] = vec[None]                                       # lane-dense int32 slab


# ----------------------------------------------------------------------------
# Pass 2: word-level co-attention (mean pooling) + FactorizationMachine
# ----------------------------------------------------------------------------

def word_fm_kernel(sel_ref,                                  # (1, 2P, L, D) bf16 selected reviews
                   w_w_ref, w_b_ref, w_m_ref,                # (D, D) bf16, (1, D) f32, (D, D) bf16
                   fm_v_ref, fm_wt_ref, fm_b_ref,            # (F, K), (1, F), (1, 1) f32
                   o_ref,                                    # (1, 8, 128) f32
                   *, L, D, P):
    dot_t = functools.partial(
        jax.lax.dot_general,
        dimension_numbers=(((1,), (1,)), ((), ())),
        preferred_element_type=jnp.float32)

    PL = P * L
    x_bf = sel_ref[0].reshape(2 * PL, D)                     # (2PL, D) bf16 (u then i)

    # One wide matmul for the shared linear over all 2P selected reviews.
    h = jnp.maximum(
        jnp.dot(x_bf, w_w_ref[...], preferred_element_type=jnp.float32)
        + w_b_ref[...], 0.0)                                  # (2PL, D) f32
    hu_all = jnp.dot(h[:PL].astype(jnp.bfloat16), w_m_ref[...],
                     preferred_element_type=jnp.float32)      # (PL, D)  u_outs @ M
    hi_all = h[PL:]                                           # (PL, D)  i_outs

    u_reprs, i_reprs = [], []
    for p in range(P):
        hu = hu_all[p * L:(p + 1) * L]                        # (L, D)
        hi = hi_all[p * L:(p + 1) * L]                        # (L, D)
        ur = x_bf[p * L:(p + 1) * L].astype(jnp.float32)      # raw selected u review
        ir = x_bf[PL + p * L:PL + (p + 1) * L].astype(jnp.float32)
        # mean pooling commutes with the affinity matmul: never build (L, L).
        hi_mean = jnp.mean(hi, axis=0, keepdims=True)         # (1, D)
        hu_mean = jnp.mean(hu, axis=0, keepdims=True)         # (1, D)
        logit_u = dot_t(hi_mean, hu)                          # (1, L) == mean_k s[:, k]
        logit_i = dot_t(hu_mean, hi)                          # (1, L) == mean_l s[l, :]
        a_u = jax.nn.softmax(logit_u, axis=-1)                # lane-major softmax
        a_i = jax.nn.softmax(logit_i, axis=-1)
        u_reprs.append(jnp.dot(a_u, ur, preferred_element_type=jnp.float32))  # (1, D)
        i_reprs.append(jnp.dot(a_i, ir, preferred_element_type=jnp.float32))  # (1, D)

    # ---------------- FactorizationMachine ('concatenate' fusion) ------------
    x_fm = jnp.concatenate(u_reprs + i_reprs, axis=1)         # (1, 2*P*D)
    lin = jnp.sum(x_fm * fm_wt_ref[...], axis=1, keepdims=True) + fm_b_ref[...]
    v = fm_v_ref[...]
    i1 = jnp.dot(x_fm, v, preferred_element_type=jnp.float32)             # (1, K)
    i2 = jnp.dot(x_fm * x_fm, v * v, preferred_element_type=jnp.float32)  # (1, K)
    pair = jnp.sum(i1 * i1 - i2, axis=1, keepdims=True)                   # (1, 1)
    pred = lin + 0.5 * pair

    # Lane-dense output slab (unmasked stores); wrapper slices [:, 0, :1].
    o_ref[...] = jnp.broadcast_to(pred, (1, 8, 128))


# ----------------------------------------------------------------------------
# Wrapper: two pallas_calls + thin JAX glue (gathers, gumbel noise)
# ----------------------------------------------------------------------------

@functools.partial(jax.jit, static_argnames=("pointer_count",))
def mpcn_forward(params, user_reviews, item_reviews, noise_key, pointer_count):
    P = pointer_count
    emb_f32 = params['emb']
    emb_bf16 = emb_f32.astype(jnp.bfloat16)
    B, R, L = user_reviews.shape
    D = emb_f32.shape[1]

    # --- glue: per-review word sums (B, 2R, D). ------------------------------
    # TODO(synk): at production fuse this gather+reduce (segment-sum) so the
    # (B, R, L, D) intermediate is never materialised in HBM.
    u_sum = jnp.sum(emb_f32[user_reviews], axis=2)               # (B, R, D)
    i_sum = jnp.sum(emb_f32[item_reviews], axis=2)               # (B, R, D)
    ui_sum = jnp.concatenate([u_sum, i_sum], axis=1)             # (B, 2R, D)

    # --- glue: gumbel noise (wrapper-side; on-chip PRNG has no interpret path)
    ku, ki = jax.random.split(noise_key)
    gum_u = jax.random.gumbel(ku, (B, R, P), jnp.float32)        # column layout
    gum_i = jax.random.gumbel(ki, (B, P, R), jnp.float32)        # row layout

    # One-time weight repacking (glue).
    g_w12 = jnp.concatenate([params['g_w1'], params['g_w2']], axis=1)   # (D, 2D)
    sel_weights = (g_w12, params['g_b2'], params['g_bg'],
                   params['r_w'], params['r_b'], params['r_m'])

    def full_spec(shape):
        zeros = (0,) * len(shape)
        return pl.BlockSpec(tuple(shape), lambda b: zeros)       # VMEM-resident weights

    # -------------------------- pass 1: selection ----------------------------
    sel_grid = pltpu.PrefetchScalarGridSpec(
        num_scalar_prefetch=0,
        grid=(B,),                                               # keep even for v7x's 2 TCs
        in_specs=[pl.BlockSpec((1, 2 * R, D), lambda b: (b, 0, 0)),
                  pl.BlockSpec((1, R, P), lambda b: (b, 0, 0)),
                  pl.BlockSpec((1, P, R), lambda b: (b, 0, 0))]
                 + [full_spec(w.shape) for w in sel_weights],
        out_specs=pl.BlockSpec((1, 8, 128), lambda b: (b, 0, 0)),
    )
    sel_out = pl.pallas_call(
        functools.partial(select_kernel, R=R, D=D, P=P),
        grid_spec=sel_grid,
        out_shape=jax.ShapeDtypeStruct((B, 8, 128), jnp.int32),
        compiler_params=pltpu.CompilerParams(
            dimension_semantics=("parallel",),
            vmem_limit_bytes=32 * 1024 * 1024),
    )(ui_sum, gum_u, gum_i, *sel_weights)

    idx = sel_out[:, 0, :2 * P]                                  # (B, 2P) int32
    idx_u, idx_i = idx[:, :P], idx[:, P:]

    # --- glue: gather ONLY the selected reviews, in bf16 -> (B, 2P, L, D) -----
    u_tok = jnp.take_along_axis(user_reviews, idx_u[:, :, None], axis=1)   # (B, P, L)
    i_tok = jnp.take_along_axis(item_reviews, idx_i[:, :, None], axis=1)   # (B, P, L)
    sel_emb = emb_bf16[jnp.concatenate([u_tok, i_tok], axis=1)]            # (B, 2P, L, D)

    w_w_bf = params['w_w'].astype(jnp.bfloat16)
    w_m_bf = params['w_m'].astype(jnp.bfloat16)
    fm_wt = params['fm_w'].T                                               # (1, F)
    word_weights = (w_w_bf, params['w_b'], w_m_bf,
                    params['fm_v'], fm_wt, params['fm_b'])

    # ------------------------ pass 2: word co-attn + FM ----------------------
    word_grid = pltpu.PrefetchScalarGridSpec(
        num_scalar_prefetch=0,
        grid=(B,),
        in_specs=[pl.BlockSpec((1, 2 * P, L, D), lambda b: (b, 0, 0, 0))]
                 + [full_spec(w.shape) for w in word_weights],
        out_specs=pl.BlockSpec((1, 8, 128), lambda b: (b, 0, 0)),
    )
    out = pl.pallas_call(
        functools.partial(word_fm_kernel, L=L, D=D, P=P),
        grid_spec=word_grid,
        out_shape=jax.ShapeDtypeStruct((B, 8, 128), jnp.float32),
        compiler_params=pltpu.CompilerParams(
            dimension_semantics=("parallel",),
            vmem_limit_bytes=48 * 1024 * 1024),                  # re-derive per generation
    )(sel_emb, *word_weights)

    return out[:, 0, :1]                                         # (B, 1)


# ----------------------------------------------------------------------------
# main
# ----------------------------------------------------------------------------

if __name__ == "__main__":
    B, R, L, D = 2, 4, 8, 32        # batch, reviews, words/review, word_dim
    V = 50                          # vocab size
    P = 2                           # pointer_count
    K = 8                           # fm_hidden
    F = 2 * P * D                   # FM input dim (concatenate fusion)

    key = jax.random.PRNGKey(0)
    ks = jax.random.split(key, 16)
    scale_d = 1.0 / jnp.sqrt(jnp.float32(D))
    scale_f = 1.0 / jnp.sqrt(jnp.float32(F))

    params = {
        # embedding table (synthetic, deterministic)
        'emb':  jax.random.normal(ks[0], (V, D), jnp.float32) * 0.1,
        # GatingMachine
        'g_w1': jax.random.normal(ks[1], (D, D), jnp.float32) * scale_d,
        'g_w2': jax.random.normal(ks[2], (D, D), jnp.float32) * scale_d,
        'g_b2': jax.random.normal(ks[3], (1, D), jnp.float32) * 0.1,
        'g_bg': jax.random.normal(ks[4], (1, D), jnp.float32),
        # review-level CoAttention (max / gumbel hard)
        'r_w':  jax.random.normal(ks[5], (D, D), jnp.float32) * scale_d,
        'r_b':  jax.random.normal(ks[6], (1, D), jnp.float32) * 0.1,
        'r_m':  jax.random.normal(ks[7], (D, D), jnp.float32) * scale_d,
        # word-level CoAttention (mean / softmax)
        'w_w':  jax.random.normal(ks[8], (D, D), jnp.float32) * scale_d,
        'w_b':  jax.random.normal(ks[9], (1, D), jnp.float32) * 0.1,
        'w_m':  jax.random.normal(ks[10], (D, D), jnp.float32) * scale_d,
        # FactorizationMachine (torch init uses zeros for v; use small random
        # values so the pairwise-interaction path is exercised)
        'fm_v': jax.random.normal(ks[11], (F, K), jnp.float32) * scale_f,
        'fm_w': jax.random.normal(ks[12], (F, 1), jnp.float32) * scale_f,
        'fm_b': jnp.zeros((1, 1), jnp.float32),
    }

    user_reviews = jax.random.randint(ks[13], (B, R, L), 0, V, dtype=jnp.int32)
    item_reviews = jax.random.randint(ks[14], (B, R, L), 0, V, dtype=jnp.int32)
    noise_key = jax.random.PRNGKey(1234)           # gumbel noise for hard selection

    pred = mpcn_forward(params, user_reviews, item_reviews, noise_key,
                        pointer_count=P)
    pred = jax.block_until_ready(pred)
    assert pred.shape == (B, 1), pred.shape
    assert bool(jnp.all(jnp.isfinite(pred)))
    print("KERNEL_OK")
</pallas_src>

<mosaic_0001>
module attributes {stable_mosaic.version = 11 : i64} {
  func.func @select_kernel(%arg0: i32, %arg1: memref<1x8x32xf32, #tpu.memory_space<vmem>>, %arg2: memref<1x4x2xf32, #tpu.memory_space<vmem>>, %arg3: memref<1x2x4xf32, #tpu.memory_space<vmem>>, %arg4: memref<32x64xf32, #tpu.memory_space<vmem>>, %arg5: memref<1x32xf32, #tpu.memory_space<vmem>>, %arg6: memref<1x32xf32, #tpu.memory_space<vmem>>, %arg7: memref<32x32xf32, #tpu.memory_space<vmem>>, %arg8: memref<1x32xf32, #tpu.memory_space<vmem>>, %arg9: memref<32x32xf32, #tpu.memory_space<vmem>>, %arg10: memref<1x8x128xi32, #tpu.memory_space<vmem>>) attributes {dimension_semantics = [#tpu.dimension_semantics<parallel>], iteration_bounds = array<i64: 2>, scalar_prefetch = 0 : i64, scratch_operands = 0 : i64, tpu.core_type = #tpu.core_type<tc>, window_params = [{transform_indices = @transform_0, window_bounds = array<i64: 1, 8, 32>}, {transform_indices = @transform_1, window_bounds = array<i64: 1, 4, 2>}, {transform_indices = @transform_2, window_bounds = array<i64: 1, 2, 4>}, {pipeline_mode = #tpu.pipeline_mode<synchronous>, transform_indices = @transform_3, window_bounds = array<i64: 32, 64>}, {pipeline_mode = #tpu.pipeline_mode<synchronous>, transform_indices = @transform_4, window_bounds = array<i64: 1, 32>}, {pipeline_mode = #tpu.pipeline_mode<synchronous>, transform_indices = @transform_5, window_bounds = array<i64: 1, 32>}, {pipeline_mode = #tpu.pipeline_mode<synchronous>, transform_indices = @transform_6, window_bounds = array<i64: 32, 32>}, {pipeline_mode = #tpu.pipeline_mode<synchronous>, transform_indices = @transform_7, window_bounds = array<i64: 1, 32>}, {pipeline_mode = #tpu.pipeline_mode<synchronous>, transform_indices = @transform_8, window_bounds = array<i64: 32, 32>}, {transform_indices = @transform_9, window_bounds = array<i64: 1, 8, 128>}]} {
    %c0 = arith.constant 0 : index
    %c0_0 = arith.constant 0 : index
    %c0_1 = arith.constant 0 : index
    %0 = vector.load %arg1[%c0, %c0_0, %c0_1] : memref<1x8x32xf32, #tpu.memory_space<vmem>>, vector<1x8x32xf32>
    %1 = vector.shape_cast %0 : vector<1x8x32xf32> to vector<8x32xf32>
    %c0_2 = arith.constant 0 : index
    %c0_3 = arith.constant 0 : index
    %2 = vector.load %arg4[%c0_2, %c0_3] : memref<32x64xf32, #tpu.memory_space<vmem>>, vector<32x64xf32>
    %cst = arith.constant dense<0.000000e+00> : vector<8x64xf32>
    %3 = tpu.matmul %1, %2, %cst {dimension_numbers = #tpu.dot_dimension_numbers<[1], [0], [0], [1], [0, 0, 1, 1], [], []>} : vector<8x32xf32>, vector<32x64xf32>, vector<8x64xf32> -> vector<8x64xf32>
    %4 = vector.extract_strided_slice %3 {offsets = [0, 0], sizes = [8, 32], strides = [1, 1]} : vector<8x64xf32> to vector<8x32xf32>
    %5 = arith.negf %4 : vector<8x32xf32>
    %6 = math.exp %5 : vector<8x32xf32>
    %cst_4 = arith.constant 1.000000e+00 : f32
    %7 = vector.broadcast %cst_4 : f32 to vector<8x32xf32>
    %8 = arith.addf %7, %6 : vector<8x32xf32>
    %9 = arith.divf %7, %8 : vector<8x32xf32>
    %c0_5 = arith.constant 0 : index
    %c0_6 = arith.constant 0 : index
    %10 = vector.load %arg6[%c0_5, %c0_6] : memref<1x32xf32, #tpu.memory_space<vmem>>, vector<1x32xf32>
    %11 = vector.extract_strided_slice %3 {offsets = [0, 32], sizes = [8, 32], strides = [1, 1]} : vector<8x64xf32> to vector<8x32xf32>
    %c0_7 = arith.constant 0 : index
    %c0_8 = arith.constant 0 : index
    %12 = vector.load %arg5[%c0_7, %c0_8] : memref<1x32xf32, #tpu.memory_space<vmem>>, vector<1x32xf32>
    %13 = vector.broadcast %12 : vector<1x32xf32> to vector<8x32xf32>
    %14 = arith.addf %11, %13 : vector<8x32xf32>
    %15 = math.tanh %14 : vector<8x32xf32>
    %16 = vector.broadcast %10 : vector<1x32xf32> to vector<8x32xf32>
    %17 = arith.mulf %16, %15 : vector<8x32xf32>
    %18 = arith.addf %9, %17 : vector<8x32xf32>
    %c0_9 = arith.constant 0 : index
    %c0_10 = arith.constant 0 : index
    %19 = vector.load %arg7[%c0_9, %c0_10] : memref<32x32xf32, #tpu.memory_space<vmem>>, vector<32x32xf32>
    %cst_11 = arith.constant dense<0.000000e+00> : vector<8x32xf32>
    %20 = tpu.matmul %18, %19, %cst_11 {dimension_numbers = #tpu.dot_dimension_numbers<[1], [0], [0], [1], [0, 0, 1, 1], [], []>} : vector<8x32xf32>, vector<32x32xf32>, vector<8x32xf32> -> vector<8x32xf32>
    %c0_12 = arith.constant 0 : index
    %c0_13 = arith.constant 0 : index
    %21 = vector.load %arg8[%c0_12, %c0_13] : memref<1x32xf32, #tpu.memory_space<vmem>>, vector<1x32xf32>
    %22 = vector.broadcast %21 : vector<1x32xf32> to vector<8x32xf32>
    %23 = arith.addf %20, %22 : vector<8x32xf32>
    %cst_14 = arith.constant 0.000000e+00 : f32
    %24 = vector.broadcast %cst_14 : f32 to vector<8x32xf32>
    %25 = arith.maximumf %23, %24 : vector<8x32xf32>
    %26 = vector.extract_strided_slice %25 {offsets = [0, 0], sizes = [4, 32], strides = [1, 1]} : vector<8x32xf32> to vector<4x32xf32>
    %c0_15 = arith.constant 0 : index
    %c0_16 = arith.constant 0 : index
    %27 = vector.load %arg9[%c0_15, %c0_16] : memref<32x32xf32, #tpu.memory_space<vmem>>, vector<32x32xf32>
    %cst_17 = arith.constant dense<0.000000e+00> : vector<4x32xf32>
    %28 = tpu.matmul %26, %27, %cst_17 {dimension_numbers = #tpu.dot_dimension_numbers<[1], [0], [0], [1], [0, 0, 1, 1], [], []>} : vector<4x32xf32>, vector<32x32xf32>, vector<4x32xf32> -> vector<4x32xf32>
    %29 = vector.extract_strided_slice %25 {offsets = [4, 0], sizes = [4, 32], strides = [1, 1]} : vector<8x32xf32> to vector<4x32xf32>
    %cst_18 = arith.constant dense<0.000000e+00> : vector<4x4xf32>
    %30 = tpu.matmul %28, %29, %cst_18 {dimension_numbers = #tpu.dot_dimension_numbers<[1], [1], [0], [0], [0, 0, 1, 0], [], []>} : vector<4x32xf32>, vector<4x32xf32>, vector<4x4xf32> -> vector<4x4xf32>
    %cst_19 = arith.constant dense<0xFF800000> : vector<4xf32>
    %31 = vector.multi_reduction <maximumf>, %30, %cst_19 [1] : vector<4x4xf32> to vector<4xf32>
    %32 = vector.shape_cast %31 : vector<4xf32> to vector<4x1xf32>
    %cst_20 = arith.constant dense<0xFF800000> : vector<4xf32>
    %33 = vector.multi_reduction <maximumf>, %30, %cst_20 [0] : vector<4x4xf32> to vector<4xf32>
    %34 = vector.shape_cast %33 : vector<4xf32> to vector<1x4xf32>
    %c0_21 = arith.constant 0 : index
    %c0_22 = arith.constant 0 : index
    %c0_23 = arith.constant 0 : index
    %35 = vector.load %arg2[%c0_21, %c0_22, %c0_23] : memref<1x4x2xf32, #tpu.memory_space<vmem>>, vector<1x4x2xf32>
    %36 = vector.shape_cast %35 : vector<1x4x2xf32> to vector<4x2xf32>
    %c0_24 = arith.constant 0 : index
    %c0_25 = arith.constant 0 : index
    %c0_26 = arith.constant 0 : index
    %37 = vector.load %arg3[%c0_24, %c0_25, %c0_26] : memref<1x2x4xf32, #tpu.memory_space<vmem>>, vector<1x2x4xf32>
    %38 = vector.shape_cast %37 : vector<1x2x4xf32> to vector<2x4xf32>
    %39 = tpu.iota {dimensions = array<i32: 0>} : vector<4x1xi32>
    %40 = tpu.iota {dimensions = array<i32: 1>} : vector<1x4xi32>
    %41 = tpu.iota {dimensions = array<i32: 1>} : vector<8x128xi32>
    %c0_i32 = arith.constant 0 : i32
    %42 = vector.broadcast %c0_i32 : i32 to vector<8x128xi32>
    %43 = vector.extract_strided_slice %36 {offsets = [0, 0], sizes = [4, 1], strides = [1, 1]} : vector<4x2xf32> to vector<4x1xf32>
    %44 = arith.addf %32, %43 : vector<4x1xf32>
    %45 = vector.extract_strided_slice %38 {offsets = [0, 0], sizes = [1, 4], strides = [1, 1]} : vector<2x4xf32> to vector<1x4xf32>
    %46 = arith.addf %34, %45 : vector<1x4xf32>
    %cst_27 = arith.constant dense<0xFF800000> : vector<1xf32>
    %47 = vector.multi_reduction <maximumf>, %44, %cst_27 [0] : vector<4x1xf32> to vector<1xf32>
    %48 = vector.shape_cast %47 : vector<1xf32> to vector<1x1xf32>
    %49 = vector.broadcast %48 : vector<1x1xf32> to vector<4x1xf32>
    %50 = arith.cmpf oge, %44, %49 : vector<4x1xf32>
    %c4_i32 = arith.constant 4 : i32
    %51 = vector.broadcast %c4_i32 : i32 to vector<4x1xi32>
    %52 = arith.select %50, %39, %51 : vector<4x1xi1>, vector<4x1xi32>
    %cst_28 = arith.constant dense<2147483647> : vector<1xi32>
    %53 = vector.multi_reduction <minsi>, %52, %cst_28 [0] : vector<4x1xi32> to vector<1xi32>
    %54 = vector.shape_cast %53 : vector<1xi32> to vector<1x1xi32>
    %cst_29 = arith.constant dense<0xFF800000> : vector<1xf32>
    %55 = vector.multi_reduction <maximumf>, %46, %cst_29 [1] : vector<1x4xf32> to vector<1xf32>
    %56 = vector.shape_cast %55 : vector<1xf32> to vector<1x1xf32>
    %57 = vector.broadcast %56 : vector<1x1xf32> to vector<1x4xf32>
    %58 = arith.cmpf oge, %46, %57 : vector<1x4xf32>
    %c4_i32_30 = arith.constant 4 : i32
    %59 = vector.broadcast %c4_i32_30 : i32 to vector<1x4xi32>
    %60 = arith.select %58, %40, %59 : vector<1x4xi1>, vector<1x4xi32>
    %cst_31 = arith.constant dense<2147483647> : vector<1xi32>
    %61 = vector.multi_reduction <minsi>, %60, %cst_31 [1] : vector<1x4xi32> to vector<1xi32>
    %62 = vector.shape_cast %61 : vector<1xi32> to vector<1x1xi32>
    %c0_i32_32 = arith.constant 0 : i32
    %63 = vector.broadcast %c0_i32_32 : i32 to vector<8x128xi32>
    %64 = arith.cmpi eq, %41, %63 : vector<8x128xi32>
    %65 = vector.shape_cast %54 : vector<1x1xi32> to vector<1x1xi32>
    %66 = vector.broadcast %65 : vector<1x1xi32> to vector<8x128xi32>
    %67 = arith.select %64, %66, %42 : vector<8x128xi1>, vector<8x128xi32>
    %c2_i32 = arith.constant 2 : i32
    %68 = vector.broadcast %c2_i32 : i32 to vector<8x128xi32>
    %69 = arith.cmpi eq, %41, %68 : vector<8x128xi32>
    %70 = vector.shape_cast %62 : vector<1x1xi32> to vector<1x1xi32>
    %71 = vector.broadcast %70 : vector<1x1xi32> to vector<8x128xi32>
    %72 = arith.select %69, %71, %67 : vector<8x128xi1>, vector<8x128xi32>
    %73 = vector.extract_strided_slice %36 {offsets = [0, 1], sizes = [4, 1], strides = [1, 1]} : vector<4x2xf32> to vector<4x1xf32>
    %74 = arith.addf %32, %73 : vector<4x1xf32>
    %75 = vector.extract_strided_slice %38 {offsets = [1, 0], sizes = [1, 4], strides = [1, 1]} : vector<2x4xf32> to vector<1x4xf32>
    %76 = arith.addf %34, %75 : vector<1x4xf32>
    %cst_33 = arith.constant dense<0xFF800000> : vector<1xf32>
    %77 = vector.multi_reduction <maximumf>, %74, %cst_33 [0] : vector<4x1xf32> to vector<1xf32>
    %78 = vector.shape_cast %77 : vector<1xf32> to vector<1x1xf32>
    %79 = vector.broadcast %78 : vector<1x1xf32> to vector<4x1xf32>
    %80 = arith.cmpf oge, %74, %79 : vector<4x1xf32>
    %c4_i32_34 = arith.constant 4 : i32
    %81 = vector.broadcast %c4_i32_34 : i32 to vector<4x1xi32>
    %82 = arith.select %80, %39, %81 : vector<4x1xi1>, vector<4x1xi32>
    %cst_35 = arith.constant dense<2147483647> : vector<1xi32>
    %83 = vector.multi_reduction <minsi>, %82, %cst_35 [0] : vector<4x1xi32> to vector<1xi32>
    %84 = vector.shape_cast %83 : vector<1xi32> to vector<1x1xi32>
    %cst_36 = arith.constant dense<0xFF800000> : vector<1xf32>
    %85 = vector.multi_reduction <maximumf>, %76, %cst_36 [1] : vector<1x4xf32> to vector<1xf32>
    %86 = vector.shape_cast %85 : vector<1xf32> to vector<1x1xf32>
    %87 = vector.broadcast %86 : vector<1x1xf32> to vector<1x4xf32>
    %88 = arith.cmpf oge, %76, %87 : vector<1x4xf32>
    %c4_i32_37 = arith.constant 4 : i32
    %89 = vector.broadcast %c4_i32_37 : i32 to vector<1x4xi32>
    %90 = arith.select %88, %40, %89 : vector<1x4xi1>, vector<1x4xi32>
    %cst_38 = arith.constant dense<2147483647> : vector<1xi32>
    %91 = vector.multi_reduction <minsi>, %90, %cst_38 [1] : vector<1x4xi32> to vector<1xi32>
    %92 = vector.shape_cast %91 : vector<1xi32> to vector<1x1xi32>
    %c1_i32 = arith.constant 1 : i32
    %93 = vector.broadcast %c1_i32 : i32 to vector<8x128xi32>
    %94 = arith.cmpi eq, %41, %93 : vector<8x128xi32>
    %95 = vector.shape_cast %84 : vector<1x1xi32> to vector<1x1xi32>
    %96 = vector.broadcast %95 : vector<1x1xi32> to vector<8x128xi32>
    %97 = arith.select %94, %96, %72 : vector<8x128xi1>, vector<8x128xi32>
    %c3_i32 = arith.constant 3 : i32
    %98 = vector.broadcast %c3_i32 : i32 to vector<8x128xi32>
    %99 = arith.cmpi eq, %41, %98 : vector<8x128xi32>
    %100 = vector.shape_cast %92 : vector<1x1xi32> to vector<1x1xi32>
    %101 = vector.broadcast %100 : vector<1x1xi32> to vector<8x128xi32>
    %102 = arith.select %99, %101, %97 : vector<8x128xi1>, vector<8x128xi32>
    %103 = vector.shape_cast %102 : vector<8x128xi32> to vector<1x8x128xi32>
    %c0_39 = arith.constant 0 : index
    %c0_40 = arith.constant 0 : index
    %c0_41 = arith.constant 0 : index
    %104 = vector.load %arg10[%c0_39, %c0_40, %c0_41] : memref<1x8x128xi32, #tpu.memory_space<vmem>>, vector<1x8x128xi32>
    tpu.vector_store %arg10[%c0_39, %c0_40, %c0_41], %103 {strides = array<i32>} : memref<1x8x128xi32, #tpu.memory_space<vmem>>, vector<1x8x128xi32>,
    return
  }
  func.func @transform_0(%arg0: i32) -> (i32, i32, i32) {
    %c0_i32 = arith.constant 0 : i32
    %c0_i32_0 = arith.constant 0 : i32
    %c0_i32_1 = arith.constant 0 : i32
    return %arg0, %c0_i32, %c0_i32_0 : i32, i32, i32
  }
  func.func @transform_1(%arg0: i32) -> (i32, i32, i32) {
    %c0_i32 = arith.constant 0 : i32
    %c0_i32_0 = arith.constant 0 : i32
    %c0_i32_1 = arith.constant 0 : i32
    return %arg0, %c0_i32, %c0_i32_0 : i32, i32, i32
  }
  func.func @transform_2(%arg0: i32) -> (i32, i32, i32) {
    %c0_i32 = arith.constant 0 : i32
    %c0_i32_0 = arith.constant 0 : i32
    %c0_i32_1 = arith.constant 0 : i32
    return %arg0, %c0_i32, %c0_i32_0 : i32, i32, i32
  }
  func.func @transform_3(%arg0: i32) -> (i32, i32) {
    %c0_i32 = arith.constant 0 : i32
    %c0_i32_0 = arith.constant 0 : i32
    %c0_i32_1 = arith.constant 0 : i32
    return %c0_i32, %c0_i32_0 : i32, i32
  }
  func.func @transform_4(%arg0: i32) -> (i32, i32) {
    %c0_i32 = arith.constant 0 : i32
    %c0_i32_0 = arith.constant 0 : i32
    %c0_i32_1 = arith.constant 0 : i32
    return %c0_i32, %c0_i32_0 : i32, i32
  }
  func.func @transform_5(%arg0: i32) -> (i32, i32) {
    %c0_i32 = arith.constant 0 : i32
    %c0_i32_0 = arith.constant 0 : i32
    %c0_i32_1 = arith.constant 0 : i32
    return %c0_i32, %c0_i32_0 : i32, i32
  }
  func.func @transform_6(%arg0: i32) -> (i32, i32) {
    %c0_i32 = arith.constant 0 : i32
    %c0_i32_0 = arith.constant 0 : i32
    %c0_i32_1 = arith.constant 0 : i32
    return %c0_i32, %c0_i32_0 : i32, i32
  }
  func.func @transform_7(%arg0: i32) -> (i32, i32) {
    %c0_i32 = arith.constant 0 : i32
    %c0_i32_0 = arith.constant 0 : i32
    %c0_i32_1 = arith.constant 0 : i32
    return %c0_i32, %c0_i32_0 : i32, i32
  }
  func.func @transform_8(%arg0: i32) -> (i32, i32) {
    %c0_i32 = arith.constant 0 : i32
    %c0_i32_0 = arith.constant 0 : i32
    %c0_i32_1 = arith.constant 0 : i32
    return %c0_i32, %c0_i32_0 : i32, i32
  }
  func.func @transform_9(%arg0: i32) -> (i32, i32, i32) {
    %c0_i32 = arith.constant 0 : i32
    %c0_i32_0 = arith.constant 0 : i32
    %c0_i32_1 = arith.constant 0 : i32
    return %arg0, %c0_i32, %c0_i32_0 : i32, i32, i32
  }
}

module attributes {stable_mosaic.version = 11 : i64} {
  func.func @word_fm_kernel(%arg0: i32, %arg1: memref<1x4x8x32xbf16, #tpu.memory_space<vmem>>, %arg2: memref<32x32xbf16, #tpu.memory_space<vmem>>, %arg3: memref<1x32xf32, #tpu.memory_space<vmem>>, %arg4: memref<32x32xbf16, #tpu.memory_space<vmem>>, %arg5: memref<128x8xf32, #tpu.memory_space<vmem>>, %arg6: memref<1x128xf32, #tpu.memory_space<vmem>>, %arg7: memref<1x1xf32, #tpu.memory_space<vmem>>, %arg8: memref<1x8x128xf32, #tpu.memory_space<vmem>>) attributes {dimension_semantics = [#tpu.dimension_semantics<parallel>], iteration_bounds = array<i64: 2>, scalar_prefetch = 0 : i64, scratch_operands = 0 : i64, tpu.core_type = #tpu.core_type<tc>, window_params = [{transform_indices = @transform_0, window_bounds = array<i64: 1, 4, 8, 32>}, {pipeline_mode = #tpu.pipeline_mode<synchronous>, transform_indices = @transform_1, window_bounds = array<i64: 32, 32>}, {pipeline_mode = #tpu.pipeline_mode<synchronous>, transform_indices = @transform_2, window_bounds = array<i64: 1, 32>}, {pipeline_mode = #tpu.pipeline_mode<synchronous>, transform_indices = @transform_3, window_bounds = array<i64: 32, 32>}, {pipeline_mode = #tpu.pipeline_mode<synchronous>, transform_indices = @transform_4, window_bounds = array<i64: 128, 8>}, {pipeline_mode = #tpu.pipeline_mode<synchronous>, transform_indices = @transform_5, window_bounds = array<i64: 1, 128>}, {pipeline_mode = #tpu.pipeline_mode<synchronous>, transform_indices = @transform_6, window_bounds = array<i64: 1, 1>}, {transform_indices = @transform_7, window_bounds = array<i64: 1, 8, 128>}]} {
    %c0 = arith.constant 0 : index
    %c0_0 = arith.constant 0 : index
    %c0_1 = arith.constant 0 : index
    %c0_2 = arith.constant 0 : index
    %0 = vector.load %arg1[%c0, %c0_0, %c0_1, %c0_2] : memref<1x4x8x32xbf16, #tpu.memory_space<vmem>>, vector<1x4x8x32xbf16>
    %1 = vector.shape_cast %0 : vector<1x4x8x32xbf16> to vector<4x8x32xbf16>
    %2 = vector.shape_cast %1 : vector<4x8x32xbf16> to vector<32x32xbf16>
    %c0_3 = arith.constant 0 : index
    %c0_4 = arith.constant 0 : index
    %3 = vector.load %arg2[%c0_3, %c0_4] : memref<32x32xbf16, #tpu.memory_space<vmem>>, vector<32x32xbf16>
    %cst = arith.constant dense<0.000000e+00> : vector<32x32xf32>
    %4 = tpu.matmul %2, %3, %cst {dimension_numbers = #tpu.dot_dimension_numbers<[1], [0], [0], [1], [0, 0, 1, 1], [], []>} : vector<32x32xbf16>, vector<32x32xbf16>, vector<32x32xf32> -> vector<32x32xf32>
    %c0_5 = arith.constant 0 : index
    %c0_6 = arith.constant 0 : index
    %5 = vector.load %arg3[%c0_5, %c0_6] : memref<1x32xf32, #tpu.memory_space<vmem>>, vector<1x32xf32>
    %6 = vector.broadcast %5 : vector<1x32xf32> to vector<32x32xf32>
    %7 = arith.addf %4, %6 : vector<32x32xf32>
    %cst_7 = arith.constant 0.000000e+00 : f32
    %8 = vector.broadcast %cst_7 : f32 to vector<32x32xf32>
    %9 = arith.maximumf %7, %8 : vector<32x32xf32>
    %10 = vector.extract_strided_slice %9 {offsets = [0, 0], sizes = [16, 32], strides = [1, 1]} : vector<32x32xf32> to vector<16x32xf32>
    %11 = arith.truncf %10 : vector<16x32xf32> to vector<16x32xbf16>
    %c0_8 = arith.constant 0 : index
    %c0_9 = arith.constant 0 : index
    %12 = vector.load %arg4[%c0_8, %c0_9] : memref<32x32xbf16, #tpu.memory_space<vmem>>, vector<32x32xbf16>
    %cst_10 = arith.constant dense<0.000000e+00> : vector<16x32xf32>
    %13 = tpu.matmul %11, %12, %cst_10 {dimension_numbers = #tpu.dot_dimension_numbers<[1], [0], [0], [1], [0, 0, 1, 1], [], []>} : vector<16x32xbf16>, vector<32x32xbf16>, vector<16x32xf32> -> vector<16x32xf32>
    %14 = vector.extract_strided_slice %9 {offsets = [16, 0], sizes = [16, 32], strides = [1, 1]} : vector<32x32xf32> to vector<16x32xf32>
    %15 = vector.extract_strided_slice %13 {offsets = [0, 0], sizes = [8, 32], strides = [1, 1]} : vector<16x32xf32> to vector<8x32xf32>
    %16 = vector.extract_strided_slice %14 {offsets = [0, 0], sizes = [8, 32], strides = [1, 1]} : vector<16x32xf32> to vector<8x32xf32>
    %17 = vector.extract_strided_slice %2 {offsets = [0, 0], sizes = [8, 32], strides = [1, 1]} : vector<32x32xbf16> to vector<8x32xbf16>
    %18 = arith.extf %17 : vector<8x32xbf16> to vector<8x32xf32>
    %19 = vector.extract_strided_slice %2 {offsets = [16, 0], sizes = [8, 32], strides = [1, 1]} : vector<32x32xbf16> to vector<8x32xbf16>
    %20 = arith.extf %19 : vector<8x32xbf16> to vector<8x32xf32>
    %cst_11 = arith.constant dense<0.000000e+00> : vector<32xf32>
    %21 = vector.multi_reduction <add>, %16, %cst_11 [0] : vector<8x32xf32> to vector<32xf32>
    %22 = vector.shape_cast %21 : vector<32xf32> to vector<1x32xf32>
    %cst_12 = arith.constant 8.000000e+00 : f32
    %23 = vector.broadcast %cst_12 : f32 to vector<1x32xf32>
    %24 = arith.divf %22, %23 : vector<1x32xf32>
    %cst_13 = arith.constant dense<0.000000e+00> : vector<32xf32>
    %25 = vector.multi_reduction <add>, %15, %cst_13 [0] : vector<8x32xf32> to vector<32xf32>
    %26 = vector.shape_cast %25 : vector<32xf32> to vector<1x32xf32>
    %cst_14 = arith.constant 8.000000e+00 : f32
    %27 = vector.broadcast %cst_14 : f32 to vector<1x32xf32>
    %28 = arith.divf %26, %27 : vector<1x32xf32>
    %cst_15 = arith.constant dense<0.000000e+00> : vector<1x8xf32>
    %29 = tpu.matmul %24, %15, %cst_15 {dimension_numbers = #tpu.dot_dimension_numbers<[1], [1], [0], [0], [0, 0, 1, 0], [], []>} : vector<1x32xf32>, vector<8x32xf32>, vector<1x8xf32> -> vector<1x8xf32>
    %cst_16 = arith.constant dense<0.000000e+00> : vector<1x8xf32>
    %30 = tpu.matmul %28, %16, %cst_16 {dimension_numbers = #tpu.dot_dimension_numbers<[1], [1], [0], [0], [0, 0, 1, 0], [], []>} : vector<1x32xf32>, vector<8x32xf32>, vector<1x8xf32> -> vector<1x8xf32>
    %cst_17 = arith.constant dense<0xFF800000> : vector<1xf32>
    %31 = vector.multi_reduction <maximumf>, %29, %cst_17 [1] : vector<1x8xf32> to vector<1xf32>
    %cst_18 = arith.constant 0xFF800000 : f32
    %32 = vector.broadcast %cst_18 : f32 to vector<1xf32>
    %33 = arith.maximumf %32, %31 : vector<1xf32>
    %34 = vector.shape_cast %33 : vector<1xf32> to vector<1x1xf32>
    %35 = vector.broadcast %34 : vector<1x1xf32> to vector<1x8xf32>
    %36 = arith.subf %29, %35 : vector<1x8xf32>
    %37 = math.exp %36 : vector<1x8xf32>
    %cst_19 = arith.constant dense<0.000000e+00> : vector<1xf32>
    %38 = vector.multi_reduction <add>, %37, %cst_19 [1] : vector<1x8xf32> to vector<1xf32>
    %39 = vector.shape_cast %38 : vector<1xf32> to vector<1x1xf32>
    %40 = vector.broadcast %39 : vector<1x1xf32> to vector<1x8xf32>
    %41 = arith.divf %37, %40 : vector<1x8xf32>
    %cst_20 = arith.constant dense<0xFF800000> : vector<1xf32>
    %42 = vector.multi_reduction <maximumf>, %30, %cst_20 [1] : vector<1x8xf32> to vector<1xf32>
    %cst_21 = arith.constant 0xFF800000 : f32
    %43 = vector.broadcast %cst_21 : f32 to vector<1xf32>
    %44 = arith.maximumf %43, %42 : vector<1xf32>
    %45 = vector.shape_cast %44 : vector<1xf32> to vector<1x1xf32>
    %46 = vector.broadcast %45 : vector<1x1xf32> to vector<1x8xf32>
    %47 = arith.subf %30, %46 : vector<1x8xf32>
    %48 = math.exp %47 : vector<1x8xf32>
    %cst_22 = arith.constant dense<0.000000e+00> : vector<1xf32>
    %49 = vector.multi_reduction <add>, %48, %cst_22 [1] : vector<1x8xf32> to vector<1xf32>
    %50 = vector.shape_cast %49 : vector<1xf32> to vector<1x1xf32>
    %51 = vector.broadcast %50 : vector<1x1xf32> to vector<1x8xf32>
    %52 = arith.divf %48, %51 : vector<1x8xf32>
    %cst_23 = arith.constant dense<0.000000e+00> : vector<1x32xf32>
    %53 = tpu.matmul %41, %18, %cst_23 {dimension_numbers = #tpu.dot_dimension_numbers<[1], [0], [0], [1], [0, 0, 1, 1], [], []>} : vector<1x8xf32>, vector<8x32xf32>, vector<1x32xf32> -> vector<1x32xf32>
    %cst_24 = arith.constant dense<0.000000e+00> : vector<1x32xf32>
    %54 = tpu.matmul %52, %20, %cst_24 {dimension_numbers = #tpu.dot_dimension_numbers<[1], [0], [0], [1], [0, 0, 1, 1], [], []>} : vector<1x8xf32>, vector<8x32xf32>, vector<1x32xf32> -> vector<1x32xf32>
    %55 = vector.extract_strided_slice %13 {offsets = [8, 0], sizes = [8, 32], strides = [1, 1]} : vector<16x32xf32> to vector<8x32xf32>
    %56 = vector.extract_strided_slice %14 {offsets = [8, 0], sizes = [8, 32], strides = [1, 1]} : vector<16x32xf32> to vector<8x32xf32>
    %57 = vector.extract_strided_slice %2 {offsets = [8, 0], sizes = [8, 32], strides = [1, 1]} : vector<32x32xbf16> to vector<8x32xbf16>
    %58 = arith.extf %57 : vector<8x32xbf16> to vector<8x32xf32>
    %59 = vector.extract_strided_slice %2 {offsets = [24, 0], sizes = [8, 32], strides = [1, 1]} : vector<32x32xbf16> to vector<8x32xbf16>
    %60 = arith.extf %59 : vector<8x32xbf16> to vector<8x32xf32>
    %cst_25 = arith.constant dense<0.000000e+00> : vector<32xf32>
    %61 = vector.multi_reduction <add>, %56, %cst_25 [0] : vector<8x32xf32> to vector<32xf32>
    %62 = vector.shape_cast %61 : vector<32xf32> to vector<1x32xf32>
    %cst_26 = arith.constant 8.000000e+00 : f32
    %63 = vector.broadcast %cst_26 : f32 to vector<1x32xf32>
    %64 = arith.divf %62, %63 : vector<1x32xf32>
    %cst_27 = arith.constant dense<0.000000e+00> : vector<32xf32>
    %65 = vector.multi_reduction <add>, %55, %cst_27 [0] : vector<8x32xf32> to vector<32xf32>
    %66 = vector.shape_cast %65 : vector<32xf32> to vector<1x32xf32>
    %cst_28 = arith.constant 8.000000e+00 : f32
    %67 = vector.broadcast %cst_28 : f32 to vector<1x32xf32>
    %68 = arith.divf %66, %67 : vector<1x32xf32>
    %cst_29 = arith.constant dense<0.000000e+00> : vector<1x8xf32>
    %69 = tpu.matmul %64, %55, %cst_29 {dimension_numbers = #tpu.dot_dimension_numbers<[1], [1], [0], [0], [0, 0, 1, 0], [], []>} : vector<1x32xf32>, vector<8x32xf32>, vector<1x8xf32> -> vector<1x8xf32>
    %cst_30 = arith.constant dense<0.000000e+00> : vector<1x8xf32>
    %70 = tpu.matmul %68, %56, %cst_30 {dimension_numbers = #tpu.dot_dimension_numbers<[1], [1], [0], [0], [0, 0, 1, 0], [], []>} : vector<1x32xf32>, vector<8x32xf32>, vector<1x8xf32> -> vector<1x8xf32>
    %cst_31 = arith.constant dense<0xFF800000> : vector<1xf32>
    %71 = vector.multi_reduction <maximumf>, %69, %cst_31 [1] : vector<1x8xf32> to vector<1xf32>
    %cst_32 = arith.constant 0xFF800000 : f32
    %72 = vector.broadcast %cst_32 : f32 to vector<1xf32>
    %73 = arith.maximumf %72, %71 : vector<1xf32>
    %74 = vector.shape_cast %73 : vector<1xf32> to vector<1x1xf32>
    %75 = vector.broadcast %74 : vector<1x1xf32> to vector<1x8xf32>
    %76 = arith.subf %69, %75 : vector<1x8xf32>
    %77 = math.exp %76 : vector<1x8xf32>
    %cst_33 = arith.constant dense<0.000000e+00> : vector<1xf32>
    %78 = vector.multi_reduction <add>, %77, %cst_33 [1] : vector<1x8xf32> to vector<1xf32>
    %79 = vector.shape_cast %78 : vector<1xf32> to vector<1x1xf32>
    %80 = vector.broadcast %79 : vector<1x1xf32> to vector<1x8xf32>
    %81 = arith.divf %77, %80 : vector<1x8xf32>
    %cst_34 = arith.constant dense<0xFF800000> : vector<1xf32>
    %82 = vector.multi_reduction <maximumf>, %70, %cst_34 [1] : vector<1x8xf32> to vector<1xf32>
    %cst_35 = arith.constant 0xFF800000 : f32
    %83 = vector.broadcast %cst_35 : f32 to vector<1xf32>
    %84 = arith.maximumf %83, %82 : vector<1xf32>
    %85 = vector.shape_cast %84 : vector<1xf32> to vector<1x1xf32>
    %86 = vector.broadcast %85 : vector<1x1xf32> to vector<1x8xf32>
    %87 = arith.subf %70, %86 : vector<1x8xf32>
    %88 = math.exp %87 : vector<1x8xf32>
    %cst_36 = arith.constant dense<0.000000e+00> : vector<1xf32>
    %89 = vector.multi_reduction <add>, %88, %cst_36 [1] : vector<1x8xf32> to vector<1xf32>
    %90 = vector.shape_cast %89 : vector<1xf32> to vector<1x1xf32>
    %91 = vector.broadcast %90 : vector<1x1xf32> to vector<1x8xf32>
    %92 = arith.divf %88, %91 : vector<1x8xf32>
    %cst_37 = arith.constant dense<0.000000e+00> : vector<1x32xf32>
    %93 = tpu.matmul %81, %58, %cst_37 {dimension_numbers = #tpu.dot_dimension_numbers<[1], [0], [0], [1], [0, 0, 1, 1], [], []>} : vector<1x8xf32>, vector<8x32xf32>, vector<1x32xf32> -> vector<1x32xf32>
    %cst_38 = arith.constant dense<0.000000e+00> : vector<1x32xf32>
    %94 = tpu.matmul %92, %60, %cst_38 {dimension_numbers = #tpu.dot_dimension_numbers<[1], [0], [0], [1], [0, 0, 1, 1], [], []>} : vector<1x8xf32>, vector<8x32xf32>, vector<1x32xf32> -> vector<1x32xf32>
    %95 = tpu.concatenate %53, %93, %54, %94 in 1 : vector<1x32xf32>, vector<1x32xf32>, vector<1x32xf32>, vector<1x32xf32> -> vector<1x128xf32>
    %c0_39 = arith.constant 0 : index
    %c0_40 = arith.constant 0 : index
    %96 = vector.load %arg6[%c0_39, %c0_40] : memref<1x128xf32, #tpu.memory_space<vmem>>, vector<1x128xf32>
    %97 = arith.mulf %95, %96 : vector<1x128xf32>
    %cst_41 = arith.constant dense<0.000000e+00> : vector<1xf32>
    %98 = vector.multi_reduction <add>, %97, %cst_41 [1] : vector<1x128xf32> to vector<1xf32>
    %99 = vector.shape_cast %98 : vector<1xf32> to vector<1x1xf32>
    %c0_42 = arith.constant 0 : index
    %c0_43 = arith.constant 0 : index
    %100 = vector.load %arg7[%c0_42, %c0_43] : memref<1x1xf32, #tpu.memory_space<vmem>>, vector<1x1xf32>
    %101 = arith.addf %99, %100 : vector<1x1xf32>
    %c0_44 = arith.constant 0 : index
    %c0_45 = arith.constant 0 : index
    %102 = vector.load %arg5[%c0_44, %c0_45] : memref<128x8xf32, #tpu.memory_space<vmem>>, vector<128x8xf32>
    %cst_46 = arith.constant dense<0.000000e+00> : vector<1x8xf32>
    %103 = tpu.matmul %95, %102, %cst_46 {dimension_numbers = #tpu.dot_dimension_numbers<[1], [0], [0], [1], [0, 0, 1, 1], [], []>} : vector<1x128xf32>, vector<128x8xf32>, vector<1x8xf32> -> vector<1x8xf32>
    %104 = arith.mulf %95, %95 : vector<1x128xf32>
    %105 = arith.mulf %102, %102 : vector<128x8xf32>
    %cst_47 = arith.constant dense<0.000000e+00> : vector<1x8xf32>
    %106 = tpu.matmul %104, %105, %cst_47 {dimension_numbers = #tpu.dot_dimension_numbers<[1], [0], [0], [1], [0, 0, 1, 1], [], []>} : vector<1x128xf32>, vector<128x8xf32>, vector<1x8xf32> -> vector<1x8xf32>
    %107 = arith.mulf %103, %103 : vector<1x8xf32>
    %108 = arith.subf %107, %106 : vector<1x8xf32>
    %cst_48 = arith.constant dense<0.000000e+00> : vector<1xf32>
    %109 = vector.multi_reduction <add>, %108, %cst_48 [1] : vector<1x8xf32> to vector<1xf32>
    %110 = vector.shape_cast %109 : vector<1xf32> to vector<1x1xf32>
    %cst_49 = arith.constant 5.000000e-01 : f32
    %111 = vector.broadcast %cst_49 : f32 to vector<1x1xf32>
    %112 = arith.mulf %111, %110 : vector<1x1xf32>
    %113 = arith.addf %101, %112 : vector<1x1xf32>
    %114 = vector.shape_cast %113 : vector<1x1xf32> to vector<1x1x1xf32>
    %115 = vector.broadcast %114 : vector<1x1x1xf32> to vector<1x8x128xf32>
    %c0_50 = arith.constant 0 : index
    %c0_51 = arith.constant 0 : index
    %c0_52 = arith.constant 0 : index
    %116 = vector.load %arg8[%c0_50, %c0_51, %c0_52] : memref<1x8x128xf32, #tpu.memory_space<vmem>>, vector<1x8x128xf32>
    tpu.vector_store %arg8[%c0_50, %c0_51, %c0_52], %115 {strides = array<i32>} : memref<1x8x128xf32, #tpu.memory_space<vmem>>, vector<1x8x128xf32>,
    return
  }
  func.func @transform_0(%arg0: i32) -> (i32, i32, i32, i32) {
    %c0_i32 = arith.constant 0 : i32
    %c0_i32_0 = arith.constant 0 : i32
    %c0_i32_1 = arith.constant 0 : i32
    %c0_i32_2 = arith.constant 0 : i32
    return %arg0, %c0_i32, %c0_i32_0, %c0_i32_1 : i32, i32, i32, i32
  }
  func.func @transform_1(%arg0: i32) -> (i32, i32) {
    %c0_i32 = arith.constant 0 : i32
    %c0_i32_0 = arith.constant 0 : i32
    %c0_i32_1 = arith.constant 0 : i32
    return %c0_i32, %c0_i32_0 : i32, i32
  }
  func.func @transform_2(%arg0: i32) -> (i32, i32) {
    %c0_i32 = arith.constant 0 : i32
    %c0_i32_0 = arith.constant 0 : i32
    %c0_i32_1 = arith.constant 0 : i32
    return %c0_i32, %c0_i32_0 : i32, i32
  }
  func.func @transform_3(%arg0: i32) -> (i32, i32) {
    %c0_i32 = arith.constant 0 : i32
    %c0_i32_0 = arith.constant 0 : i32
    %c0_i32_1 = arith.constant 0 : i32
    return %c0_i32, %c0_i32_0 : i32, i32
  }
  func.func @transform_4(%arg0: i32) -> (i32, i32) {
    %c0_i32 = arith.constant 0 : i32
    %c0_i32_0 = arith.constant 0 : i32
    %c0_i32_1 = arith.constant 0 : i32
    return %c0_i32, %c0_i32_0 : i32, i32
  }
  func.func @transform_5(%arg0: i32) -> (i32, i32) {
    %c0_i32 = arith.constant 0 : i32
    %c0_i32_0 = arith.constant 0 : i32
    %c0_i32_1 = arith.constant 0 : i32
    return %c0_i32, %c0_i32_0 : i32, i32
  }
  func.func @transform_6(%arg0: i32) -> (i32, i32) {
    %c0_i32 = arith.constant 0 : i32
    %c0_i32_0 = arith.constant 0 : i32
    %c0_i32_1 = arith.constant 0 : i32
    return %c0_i32, %c0_i32_0 : i32, i32
  }
  func.func @transform_7(%arg0: i32) -> (i32, i32, i32) {
    %c0_i32 = arith.constant 0 : i32
    %c0_i32_0 = arith.constant 0 : i32
    %c0_i32_1 = arith.constant 0 : i32
    return %arg0, %c0_i32, %c0_i32_0 : i32, i32, i32
  }
}

</mosaic_0001>

<llo_original>
// kernel: mpcn_forward.2
$region0: #{mpcn_forward.2}
  #allocation0 [shape = 'u32[]', space=smem, size = 0x4, offset = 0x4, fixed_abs, tag = 'smem constant byte address 0x4 - core index']
  #allocation1 [shape = 'u32[144,128]{1,0:T(1,128)}', space=vmem, size = 0x12000, scoped, tag = 'internal scratch']
  %s0 = inlined_call_operand.vmem [shape: f32[2,8,32], index: 0, kind: input, shape index: {}]
  %s1 = inlined_call_operand.vmem [shape: f32[2,4,2], index: 1, kind: input, shape index: {}]
  %s2 = inlined_call_operand.vmem [shape: f32[2,2,4], index: 2, kind: input, shape index: {}]
  %s3 = inlined_call_operand.vmem [shape: f32[32,64], index: 3, kind: input, shape index: {}]
  %s4 = inlined_call_operand.vmem [shape: f32[1,32], index: 4, kind: input, shape index: {}]
  %s5 = inlined_call_operand.vmem [shape: f32[1,32], index: 5, kind: input, shape index: {}]
  %s6 = inlined_call_operand.vmem [shape: f32[32,32], index: 6, kind: input, shape index: {}]
  %s7 = inlined_call_operand.vmem [shape: f32[1,32], index: 7, kind: input, shape index: {}]
  %s8 = inlined_call_operand.vmem [shape: f32[32,32], index: 8, kind: input, shape index: {}]
  %s9 = inlined_call_operand.vmem [shape: s32[2,8,128], index: 9, kind: output, shape index: {}]
  %s10 = sld [smem:[#allocation0]]
  $region69: #{mpcn_forward.2} parent=0
    _
  %s12 = ssub.s32 1, %s10
  %s13 = scalar_select 0, %s12, %s10
  loop: start=0, step=1, limit=4
  $region2: #{mpcn_forward.2} parent=0 // loop_pre_header
    _
  $region3: #{mpcn_forward.2} parent=0 // loop_header
    %s15 = sphi 0, %s19
    %p16 = scmp.ge.s32.totalorder %s15, 4
    %s25 = sphi 0, %s27
    %s28 = sphi 0, %s25
    %s29 = sphi 0, %s28
    %s45 = sphi 0, %s29
    %s51 = sphi 0, %s53
    %s54 = sphi 0, %s51
    %s55 = sphi 0, %s54
    %s71 = sphi 0, %s55
    %s77 = sphi 0, %s79
    %s80 = sphi 0, %s77
    %s81 = sphi 0, %s80
    %s97 = sphi 0, %s81
    %s101 = sphi 0, %s101
    %s103 = sphi 0, %s101
    %s104 = sphi 0, %s103
    %s118 = sphi 0, %s104
    %s122 = sphi 0, %s122
    %s124 = sphi 0, %s122
    %s125 = sphi 0, %s124
    %s139 = sphi 0, %s125
    %s143 = sphi 0, %s143
    %s145 = sphi 0, %s143
    %s146 = sphi 0, %s145
    %s160 = sphi 0, %s146
    %s164 = sphi 0, %s164
    %s166 = sphi 0, %s164
    %s167 = sphi 0, %s166
    %s181 = sphi 0, %s167
    %s185 = sphi 0, %s185
    %s187 = sphi 0, %s185
    %s188 = sphi 0, %s187
    %s202 = sphi 0, %s188
    %s206 = sphi 0, %s206
    %s208 = sphi 0, %s206
    %s209 = sphi 0, %s208
    %s223 = sphi 0, %s209
    %s229 = sphi 0, %s231
    %s232 = sphi 0, %s229
    %s233 = sphi 0, %s232
    %s249 = sphi 0, %s233
  $region4: #{mpcn_forward.2} parent=0 // loop_header_branch
    %18 = sbr.rel (%p16) target = $region8
  $region5: #{mpcn_forward.2} parent=0 // loop_body
    %s20 = ssub.s32 %s15, 1
    %s21 = ssub.s32 %s15, 2
    %s22 = sadd.s32 %s15, 1
    %s23 = ssub.s32 %s15, %s22
    %p24 = scmp.eq.s32.totalorder %s23, 0
    %s26 = sadd.s32 %s25, 1
    %s27 = scalar_select %p24, %s25, %s26
    %p30 = pneg %p24
    %p31 = scmp.eq.s32.totalorder %s15, 1
    %p32 = por %p30, %p31
    %p33 = scmp.ne.s32.totalorder %s25, %s28
    %p34 = scmp.eq.s32.totalorder %s15, 0
    %p35 = por %p33, %p34
    %p36 = scmp.ne.s32.totalorder %s25, %s28
    %p37 = scmp.eq.s32.totalorder %s20, 1
    %p38 = por %p36, %p37
    %p39 = scmp.ne.s32.totalorder %s28, %s29
    %p40 = scmp.eq.s32.totalorder %s20, 0
    %p41 = por %p39, %p40
    %p42 = scmp.ne.s32.totalorder %s28, %s29
    %p43 = scmp.eq.s32.totalorder %s21, 1
    %p44 = por %p42, %p43
    %p46 = scmp.ne.s32.totalorder %s29, %s45
    %p47 = scmp.eq.s32.totalorder %s21, 0
    %p48 = por %p46, %p47
    %s49 = ssub.s32 %s15, %s22
    %p50 = scmp.eq.s32.totalorder %s49, 0
    %s52 = sadd.s32 %s51, 1
    %s53 = scalar_select %p50, %s51, %s52
    %p56 = pneg %p50
    %p57 = scmp.eq.s32.totalorder %s15, 1
    %p58 = por %p56, %p57
    %p59 = scmp.ne.s32.totalorder %s51, %s54
    %p60 = scmp.eq.s32.totalorder %s15, 0
    %p61 = por %p59, %p60
    %p62 = scmp.ne.s32.totalorder %s51, %s54
    %p63 = scmp.eq.s32.totalorder %s20, 1
    %p64 = por %p62, %p63
    %p65 = scmp.ne.s32.totalorder %s54, %s55
    %p66 = scmp.eq.s32.totalorder %s20, 0
    %p67 = por %p65, %p66
    %p68 = scmp.ne.s32.totalorder %s54, %s55
    %p69 = scmp.eq.s32.totalorder %s21, 1
    %p70 = por %p68, %p69
    %p72 = scmp.ne.s32.totalorder %s55, %s71
    %p73 = scmp.eq.s32.totalorder %s21, 0
    %p74 = por %p72, %p73
    %s75 = ssub.s32 %s15, %s22
    %p76 = scmp.eq.s32.totalorder %s75, 0
    %s78 = sadd.s32 %s77, 1
    %s79 = scalar_select %p76, %s77, %s78
    %p82 = pneg %p76
    %p83 = scmp.eq.s32.totalorder %s15, 1
    %p84 = por %p82, %p83
    %p85 = scmp.ne.s32.totalorder %s77, %s80
    %p86 = scmp.eq.s32.totalorder %s15, 0
    %p87 = por %p85, %p86
    %p88 = scmp.ne.s32.totalorder %s77, %s80
    %p89 = scmp.eq.s32.totalorder %s20, 1
    %p90 = por %p88, %p89
    %p91 = scmp.ne.s32.totalorder %s80, %s81
    %p92 = scmp.eq.s32.totalorder %s20, 0
    %p93 = por %p91, %p92
    %p94 = scmp.ne.s32.totalorder %s80, %s81
    %p95 = scmp.eq.s32.totalorder %s21, 1
    %p96 = por %p94, %p95
    %p98 = scmp.ne.s32.totalorder %s81, %s97
    %p99 = scmp.eq.s32.totalorder %s21, 0
    %p100 = por %p98, %p99
    %s102 = sadd.s32 %s101, 1
    %p105 = scmp.eq.s32.totalorder %s15, 1
    %p106 = scmp.ne.s32.totalorder %s101, %s103
    %p107 = scmp.eq.s32.totalorder %s15, 0
    %p108 = por %p106, %p107
    %p109 = scmp.ne.s32.totalorder %s101, %s103
    %p110 = scmp.eq.s32.totalorder %s20, 1
    %p111 = por %p109, %p110
    %p112 = scmp.ne.s32.totalorder %s103, %s104
    %p113 = scmp.eq.s32.totalorder %s20, 0
    %p114 = por %p112, %p113
    %p115 = scmp.ne.s32.totalorder %s103, %s104
    %p116 = scmp.eq.s32.totalorder %s21, 1
    %p117 = por %p115, %p116
    %p119 = scmp.ne.s32.totalorder %s104, %s118
    %p120 = scmp.eq.s32.totalorder %s21, 0
    %p121 = por %p119, %p120
    %s123 = sadd.s32 %s122, 1
    %p126 = scmp.eq.s32.totalorder %s15, 1
    %p127 = scmp.ne.s32.totalorder %s122, %s124
    %p128 = scmp.eq.s32.totalorder %s15, 0
    %p129 = por %p127, %p128
    %p130 = scmp.ne.s32.totalorder %s122, %s124
    %p131 = scmp.eq.s32.totalorder %s20, 1
    %p132 = por %p130, %p131
    %p133 = scmp.ne.s32.totalorder %s124, %s125
    %p134 = scmp.eq.s32.totalorder %s20, 0
    %p135 = por %p133, %p134
    %p136 = scmp.ne.s32.totalorder %s124, %s125
    %p137 = scmp.eq.s32.totalorder %s21, 1
    %p138 = por %p136, %p137
    %p140 = scmp.ne.s32.totalorder %s125, %s139
    %p141 = scmp.eq.s32.totalorder %s21, 0
    %p142 = por %p140, %p141
    %s144 = sadd.s32 %s143, 1
    %p147 = scmp.eq.s32.totalorder %s15, 1
    %p148 = scmp.ne.s32.totalorder %s143, %s145
    %p149 = scmp.eq.s32.totalorder %s15, 0
    %p150 = por %p148, %p149
    %p151 = scmp.ne.s32.totalorder %s143, %s145
    %p152 = scmp.eq.s32.totalorder %s20, 1
    %p153 = por %p151, %p152
    %p154 = scmp.ne.s32.totalorder %s145, %s146
    %p155 = scmp.eq.s32.totalorder %s20, 0
    %p156 = por %p154, %p155
    %p157 = scmp.ne.s32.totalorder %s145, %s146
    %p158 = scmp.eq.s32.totalorder %s21, 1
    %p159 = por %p157, %p158
    %p161 = scmp.ne.s32.totalorder %s146, %s160
    %p162 = scmp.eq.s32.totalorder %s21, 0
    %p163 = por %p161, %p162
    %s165 = sadd.s32 %s164, 1
    %p168 = scmp.eq.s32.totalorder %s15, 1
    %p169 = scmp.ne.s32.totalorder %s164, %s166
    %p170 = scmp.eq.s32.totalorder %s15, 0
    %p171 = por %p169, %p170
    %p172 = scmp.ne.s32.totalorder %s164, %s166
    %p173 = scmp.eq.s32.totalorder %s20, 1
    %p174 = por %p172, %p173
    %p175 = scmp.ne.s32.totalorder %s166, %s167
    %p176 = scmp.eq.s32.totalorder %s20, 0
    %p177 = por %p175, %p176
    %p178 = scmp.ne.s32.totalorder %s166, %s167
    %p179 = scmp.eq.s32.totalorder %s21, 1
    %p180 = por %p178, %p179
    %p182 = scmp.ne.s32.totalorder %s167, %s181
    %p183 = scmp.eq.s32.totalorder %s21, 0
    %p184 = por %p182, %p183
    %s186 = sadd.s32 %s185, 1
    %p189 = scmp.eq.s32.totalorder %s15, 1
    %p190 = scmp.ne.s32.totalorder %s185, %s187
    %p191 = scmp.eq.s32.totalorder %s15, 0
    %p192 = por %p190, %p191
    %p193 = scmp.ne.s32.totalorder %s185, %s187
    %p194 = scmp.eq.s32.totalorder %s20, 1
    %p195 = por %p193, %p194
    %p196 = scmp.ne.s32.totalorder %s187, %s188
    %p197 = scmp.eq.s32.totalorder %s20, 0
    %p198 = por %p196, %p197
    %p199 = scmp.ne.s32.totalorder %s187, %s188
    %p200 = scmp.eq.s32.totalorder %s21, 1
    %p201 = por %p199, %p200
    %p203 = scmp.ne.s32.totalorder %s188, %s202
    %p204 = scmp.eq.s32.totalorder %s21, 0
    %p205 = por %p203, %p204
    %s207 = sadd.s32 %s206, 1
    %p210 = scmp.eq.s32.totalorder %s15, 1
    %p211 = scmp.ne.s32.totalorder %s206, %s208
    %p212 = scmp.eq.s32.totalorder %s15, 0
    %p213 = por %p211, %p212
    %p214 = scmp.ne.s32.totalorder %s206, %s208
    %p215 = scmp.eq.s32.totalorder %s20, 1
    %p216 = por %p214, %p215
    %p217 = scmp.ne.s32.totalorder %s208, %s209
    %p218 = scmp.eq.s32.totalorder %s20, 0
    %p219 = por %p217, %p218
    %p220 = scmp.ne.s32.totalorder %s208, %s209
    %p221 = scmp.eq.s32.totalorder %s21, 1
    %p222 = por %p220, %p221
    %p224 = scmp.ne.s32.totalorder %s209, %s223
    %p225 = scmp.eq.s32.totalorder %s21, 0
    %p226 = por %p224, %p225
    %s227 = ssub.s32 %s15, %s22
    %p228 = scmp.eq.s32.totalorder %s227, 0
    %s230 = sadd.s32 %s229, 1
    %s231 = scalar_select %p228, %s229, %s230
    %p234 = pneg %p228
    %p235 = scmp.eq.s32.totalorder %s15, 1
    %p236 = por %p234, %p235
    %p237 = scmp.ne.s32.totalorder %s229, %s232
    %p238 = scmp.eq.s32.totalorder %s15, 0
    %p239 = por %p237, %p238
    %p240 = scmp.ne.s32.totalorder %s229, %s232
    %p241 = scmp.eq.s32.totalorder %s20, 1
    %p242 = por %p240, %p241
    %p243 = scmp.ne.s32.totalorder %s232, %s233
    %p244 = scmp.eq.s32.totalorder %s20, 0
    %p245 = por %p243, %p244
    %p246 = scmp.ne.s32.totalorder %s232, %s233
    %p247 = scmp.eq.s32.totalorder %s21, 1
    %p248 = por %p246, %p247
    %p250 = scmp.ne.s32.totalorder %s233, %s249
    %p251 = scmp.eq.s32.totalorder %s21, 0
    %p252 = por %p250, %p251
    %p253 = scmp.le.s32.totalorder 1, %s15
    %p254 = scmp.lt.s32.totalorder %s15, 3
    %p255 = pnand %p253, %p254
    %p256 = pneg %p255
    // Predicated region
    $region9: #{mpcn_forward.2} parent=5 // pred_check
      _
    $region10: #{mpcn_forward.2} parent=5 // pred_check_branch
      %258 = sbr.rel (%p255) target = $region12
    $region11: #{mpcn_forward.2} parent=5 // pred_region
      %s259 = ssub.s32 %s15, 1
      // Predicated region
      $region13: #{mpcn_forward.2} parent=11 // pred_check
        %p260 = pneg %p114
      $region14: #{mpcn_forward.2} parent=11 // pred_check_branch
        %262 = sbr.rel (%p260) target = $region16
      $region15: #{mpcn_forward.2} parent=11 // pred_region
        _
      $region16: #{mpcn_forward.2} parent=11 // pred_fallthru
        _
      // Predicated region
      $region17: #{mpcn_forward.2} parent=11 // pred_check
        %p263 = pneg %p135
      $region18: #{mpcn_forward.2} parent=11 // pred_check_branch
        %265 = sbr.rel (%p263) target = $region20
      $region19: #{mpcn_forward.2} parent=11 // pred_region
        _
      $region20: #{mpcn_forward.2} parent=11 // pred_fallthru
        _
      // Predicated region
      $region21: #{mpcn_forward.2} parent=11 // pred_check
        %p266 = pneg %p156
      $region22: #{mpcn_forward.2} parent=11 // pred_check_branch
        %268 = sbr.rel (%p266) target = $region24
      $region23: #{mpcn_forward.2} parent=11 // pred_region
        _
      $region24: #{mpcn_forward.2} parent=11 // pred_fallthru
        _
      // Predicated region
      $region25: #{mpcn_forward.2} parent=11 // pred_check
        %p269 = pneg %p177
      $region26: #{mpcn_forward.2} parent=11 // pred_check_branch
        %271 = sbr.rel (%p269) target = $region28
      $region27: #{mpcn_forward.2} parent=11 // pred_region
        _
      $region28: #{mpcn_forward.2} parent=11 // pred_fallthru
        _
      // Predicated region
      $region29: #{mpcn_forward.2} parent=11 // pred_check
        %p272 = pneg %p198
      $region30: #{mpcn_forward.2} parent=11 // pred_check_branch
        %274 = sbr.rel (%p272) target = $region32
      $region31: #{mpcn_forward.2} parent=11 // pred_region
        _
      $region32: #{mpcn_forward.2} parent=11 // pred_fallthru
        _
      // Predicated region
      $region33: #{mpcn_forward.2} parent=11 // pred_check
        %p275 = pneg %p219
      $region34: #{mpcn_forward.2} parent=11 // pred_check_branch
        %277 = sbr.rel (%p275) target = $region36
      $region35: #{mpcn_forward.2} parent=11 // pred_region
        _
      $region36: #{mpcn_forward.2} parent=11 // pred_fallthru
        _
    $region12: #{mpcn_forward.2} parent=5 // pred_fallthru
      _
    %p278 = scmp.lt.s32.totalorder %s15, 2
    // Predicated region
    $region37: #{mpcn_forward.2} parent=5 // pred_check
      %p279 = pneg %p278
    $region38: #{mpcn_forward.2} parent=5 // pred_check_branch
      %281 = sbr.rel (%p279) target = $region40
    $region39: #{mpcn_forward.2} parent=5 // pred_region
      // Predicated region
      $region41: #{mpcn_forward.2} parent=39 // pred_check
        %p282 = pneg %p35
      $region42: #{mpcn_forward.2} parent=39 // pred_check_branch
        %284 = sbr.rel (%p282) target = $region44
      $region43: #{mpcn_forward.2} parent=39 // pred_region
        %p285 = scmp.lt.s32.totalorder %s15, 1
        %s286 = scalar_select %p285, %s15, 1
        %s287 = smul.addr %s286, 8
        %s288 = scalar_lea.vmem %s0, %s287
      $region44: #{mpcn_forward.2} parent=39 // pred_fallthru
        _
      // Predicated region
      $region45: #{mpcn_forward.2} parent=39 // pred_check
        %p289 = pneg %p61
      $region46: #{mpcn_forward.2} parent=39 // pred_check_branch
        %291 = sbr.rel (%p289) target = $region48
      $region47: #{mpcn_forward.2} parent=39 // pred_region
        %p292 = scmp.lt.s32.totalorder %s15, 1
        %s293 = scalar_select %p292, %s15, 1
        %s294 = smul.addr %s293, 4
        %s295 = scalar_lea.vmem %s1, %s294
      $region48: #{mpcn_forward.2} parent=39 // pred_fallthru
        _
      // Predicated region
      $region49: #{mpcn_forward.2} parent=39 // pred_check
        %p296 = pneg %p87
      $region50: #{mpcn_forward.2} parent=39 // pred_check_branch
        %298 = sbr.rel (%p296) target = $region52
      $region51: #{mpcn_forward.2} parent=39 // pred_region
        %p299 = scmp.lt.s32.totalorder %s15, 1
        %s300 = scalar_select %p299, %s15, 1
        %s301 = smul.addr %s300, 2
        %s302 = scalar_lea.vmem %s2, %s301
      $region52: #{mpcn_forward.2} parent=39 // pred_fallthru
        _
    $region40: #{mpcn_forward.2} parent=5 // pred_fallthru
      _
    %p303 = scmp.le.s32.totalorder 1, %s15
    %p304 = scmp.lt.s32.totalorder %s15, 3
    %p305 = pnand %p303, %p304
    %p306 = pneg %p305
    // Predicated region
    $region53: #{mpcn_forward.2} parent=5 // pred_check
      _
    $region54: #{mpcn_forward.2} parent=5 // pred_check_branch
      %308 = sbr.rel (%p305) target = $region56
    $region55: #{mpcn_forward.2} parent=5 // pred_region
      %s309 = ssub.s32 %s15, 1
      %p310 = scmp.lt.s32.totalorder %s20, 1
      %s311 = scalar_select %p310, %s20, 1
      %s312 = smul.addr %s311, 8
      %s313 = scalar_lea.vmem %s0, %s312
      %p314 = pneg %p41
      %p315 = pneg %p38
      %p316 = scmp.lt.s32.totalorder %s20, 1
      %s317 = scalar_select %p316, %s20, 1
      %s318 = smul.addr %s317, 4
      %s319 = scalar_lea.vmem %s1, %s318
      %p320 = pneg %p67
      %p321 = pneg %p64
      %p322 = scmp.lt.s32.totalorder %s20, 1
      %s323 = scalar_select %p322, %s20, 1
      %s324 = smul.addr %s323, 2
      %s325 = scalar_lea.vmem %s2, %s324
      %p326 = pneg %p93
      %p327 = pneg %p90
      %p328 = pneg %p114
      %p329 = pneg %p111
      %p330 = pneg %p135
      %p331 = pneg %p132
      %p332 = pneg %p156
      %p333 = pneg %p153
      %p334 = pneg %p177
      %p335 = pneg %p174
      %p336 = pneg %p198
      %p337 = pneg %p195
      %p338 = pneg %p219
      %p339 = pneg %p216
      %p340 = pneg %p245
      %p341 = pneg %p242
      %p342 = scmp.lt.s32.totalorder %s20, 1
      %s343 = scalar_select %p342, %s20, 1
      %s344 = smul.addr %s343, 8
      %s345 = scalar_lea.vmem %s9, %s344
      %p346 = scmp.lt.s32.totalorder %s20, 1
      %s347 = scalar_select %p346, %s20, 1
      %s348 = smul.addr %s347, 8
      %s349 = scalar_lea.vmem %s0, %s348
      %p350 = scmp.lt.s32.totalorder %s20, 1
      %s351 = scalar_select %p350, %s20, 1
      %s352 = smul.addr %s351, 4
      %s353 = scalar_lea.vmem %s1, %s352
      %p354 = scmp.lt.s32.totalorder %s20, 1
      %s355 = scalar_select %p354, %s20, 1
      %s356 = smul.addr %s355, 2
      %s357 = scalar_lea.vmem %s2, %s356
      %p358 = scmp.lt.s32.totalorder %s20, 1
      %s359 = scalar_select %p358, %s20, 1
      %s360 = smul.addr %s359, 8
      %s361 = scalar_lea.vmem %s9, %s360
      %v362 = vld [vmem:[%s349] sm:$0xff]
      %v363 = vld [vmem:[%s3] sm:$0xff]
      %v364 = vld [vmem:[%s3 + $0x8] sm:$0xff]
      %v365 = vld [vmem:[%s3 + $0x10] sm:$0xff]
      %v366 = vld [vmem:[%s3 + $0x18] sm:$0xff]
      %vm367 = vcmask 261120
      %v369 = vsel %vm367, %v362, 0
      %371 = vmatprep.subr.mxu0 0.0
      %372 = vmatpush1.msra.mxu0 0.0
      %373 = vmatprep.subr.mxu0 0.0
      %374 = vmatpush1.msra.mxu0 0.0
      %375 = vmatprep.subr.mxu0 0.0
      %376 = vmatpush1.msra.mxu0 0.0
      %377 = vmatprep.subr.mxu0 0.0
      %378 = vmatpush1.msra.mxu0 0.0
      %379 = vmatprep.subr.mxu0 0.0
      %380 = vmatpush1.msra.mxu0 0.0
      %381 = vmatprep.subr.mxu0 0.0
      %382 = vmatpush1.msra.mxu0 0.0
      %383 = vmatprep.subr.mxu0 0.0
      %384 = vmatpush1.msra.mxu0 0.0
      %385 = vmatprep.subr.mxu0 0.0
      %386 = vmatpush1.msra.mxu0 0.0
      %387 = vmatprep.subr.mxu0 0.0
      %388 = vmatpush1.msra.mxu0 0.0
      %389 = vmatprep.subr.mxu0 0.0
      %390 = vmatpush1.msra.mxu0 0.0
      %391 = vmatprep.subr.mxu0 0.0
      %392 = vmatpush1.msra.mxu0 0.0
      %393 = vmatprep.subr.mxu0 0.0
      %394 = vmatpush1.msra.mxu0 0.0
      %395 = vmatprep.subr.mxu0 0.0
      %396 = vmatpush1.msra.mxu0 %v366
      %397 = vmatprep.subr.mxu0 0.0
      %398 = vmatpush1.msra.mxu0 %v365
      %399 = vmatprep.subr.mxu0 0.0
      %400 = vmatpush1.msra.mxu0 %v364
      %401 = vmatprep.subr.mxu0 0.0
      %402 = vmatpush1.msra.mxu0 %v363
      %403 = vmatprep.subr.mxu0 0.0
      %404 = vmatpush2.msra.mxu0 0.0
      %405 = vmatprep.subr.mxu0 0.0
      %406 = vmatpush2.msra.mxu0 0.0
      %407 = vmatprep.subr.mxu0 0.0
      %408 = vmatpush2.msra.mxu0 0.0
      %409 = vmatprep.subr.mxu0 0.0
      %410 = vmatpush2.msra.mxu0 0.0
      %411 = vmatprep.subr.mxu0 0.0
      %412 = vmatpush2.msra.mxu0 0.0
      %413 = vmatprep.subr.mxu0 0.0
      %414 = vmatpush2.msra.mxu0 0.0
      %415 = vmatprep.subr.mxu0 0.0
      %416 = vmatpush2.msra.mxu0 0.0
      %417 = vmatprep.subr.mxu0 0.0
      %418 = vmatpush2.msra.mxu0 0.0
      %419 = vmatprep.subr.mxu0 0.0
      %420 = vmatpush2.msra.mxu0 0.0
      %421 = vmatprep.subr.mxu0 0.0
      %422 = vmatpush2.msra.mxu0 0.0
      %423 = vmatprep.subr.mxu0 0.0
      %424 = vmatpush2.msra.mxu0 0.0
      %425 = vmatprep.subr.mxu0 0.0
      %426 = vmatpush2.msra.mxu0 0.0
      %427 = vmatprep.subr.mxu0 0.0
      %428 = vmatpush2.msra.mxu0 0.0
      %429 = vmatprep.subr.mxu0 0.0
      %430 = vmatpush2.msra.mxu0 0.0
      %431 = vmatprep.subr.mxu0 0.0
      %432 = vmatpush2.msra.mxu0 0.0
      %433 = vmatprep.subr.mxu0 0.0
      %434 = vmatpush2.msra.mxu0 0.0
      %435 = vmatprep.mubr.f32.mxu0 0.0
      %436 = vmatmul.mubr.f32.gmra.mxu0 %v369
      %v437 = vpop.f32.mrf.mxu0
      %v438 = vadd.f32 0.0, %v437
      %v439 = vpop.f32.mrf.mxu0
      %440 = vdwg.mxu0
      %v441 = vxor.u32 %v438, 2147483648
      %v442 = vmul.f32 %v441, 1.442695
      %v443 = vpow.pop %v442
      %v444 = vadd.f32 %v443, 1.0
      %v445 = vrcp.pop %v444
      %v446 = vmul.f32 1.0, %v445
      %v447 = vld [vmem:[%s5] sm:$0x1]
      %v448 = vld [vmem:[%s4] sm:$0x1]
      %v450 = vlaneseq
      %v451 = vshrl.u32 %v450, 7
      %v452 = vsub.s32 0, %v451
      %v453 = vrot.slane %v448, %v452
      %454 = vrot.lane.b32.xlu0 %v453, 32
      %v455 = vpop.permute.xlu0 %454
      %v457 = vadd.f32 %v438, %v455
      %v458 = vtanh.pop %v457
      %v460 = vlaneseq
      %v461 = vshrl.u32 %v460, 7
      %v462 = vsub.s32 0, %v461
      %v463 = vrot.slane %v447, %v462
      %466 = vrot.lane.b32.xlu0 %v458, 96
      %v467 = vpop.permute.xlu0 %466
      %v469 = vmul.f32 %v463, %v467
      %v470 = vadd.f32 %v446, %v469
      %v471 = vld [vmem:[%s6] sm:$0xff]
      %v472 = vld [vmem:[%s6 + $0x8] sm:$0xff]
      %v473 = vld [vmem:[%s6 + $0x10] sm:$0xff]
      %v474 = vld [vmem:[%s6 + $0x18] sm:$0xff]
      %v475 = vld [vmem:[%s7] sm:$0x1]
      %v477 = vlaneseq
      %v478 = vshrl.u32 %v477, 7
      %v479 = vsub.s32 0, %v478
      %v480 = vrot.slane %v475, %v479
      %v483 = vsel %vm367, %v470, 0
      %485 = vmatprep.subr.mxu0 0.0
      %486 = vmatpush1.msra.mxu0 0.0
      %487 = vmatprep.subr.mxu0 0.0
      %488 = vmatpush1.msra.mxu0 0.0
      %489 = vmatprep.subr.mxu0 0.0
      %490 = vmatpush1.msra.mxu0 0.0
      %491 = vmatprep.subr.mxu0 0.0
      %492 = vmatpush1.msra.mxu0 0.0
      %493 = vmatprep.subr.mxu0 0.0
      %494 = vmatpush1.msra.mxu0 0.0
      %495 = vmatprep.subr.mxu0 0.0
      %496 = vmatpush1.msra.mxu0 0.0
      %497 = vmatprep.subr.mxu0 0.0
      %498 = vmatpush1.msra.mxu0 0.0
      %499 = vmatprep.subr.mxu0 0.0
      %500 = vmatpush1.msra.mxu0 0.0
      %501 = vmatprep.subr.mxu0 0.0
      %502 = vmatpush1.msra.mxu0 0.0
      %503 = vmatprep.subr.mxu0 0.0
      %504 = vmatpush1.msra.mxu0 0.0
      %505 = vmatprep.subr.mxu0 0.0
      %506 = vmatpush1.msra.mxu0 0.0
      %507 = vmatprep.subr.mxu0 0.0
      %508 = vmatpush1.msra.mxu0 0.0
      %509 = vmatprep.subr.mxu0 0.0
      %510 = vmatpush1.msra.mxu0 %v474
      %511 = vmatprep.subr.mxu0 0.0
      %512 = vmatpush1.msra.mxu0 %v473
      %513 = vmatprep.subr.mxu0 0.0
      %514 = vmatpush1.msra.mxu0 %v472
      %515 = vmatprep.subr.mxu0 0.0
      %516 = vmatpush1.msra.mxu0 %v471
      %517 = vmatprep.subr.mxu0 0.0
      %518 = vmatpush2.msra.mxu0 0.0
      %519 = vmatprep.subr.mxu0 0.0
      %520 = vmatpush2.msra.mxu0 0.0
      %521 = vmatprep.subr.mxu0 0.0
      %522 = vmatpush2.msra.mxu0 0.0
      %523 = vmatprep.subr.mxu0 0.0
      %524 = vmatpush2.msra.mxu0 0.0
      %525 = vmatprep.subr.mxu0 0.0
      %526 = vmatpush2.msra.mxu0 0.0
      %527 = vmatprep.subr.mxu0 0.0
      %528 = vmatpush2.msra.mxu0 0.0
      %529 = vmatprep.subr.mxu0 0.0
      %530 = vmatpush2.msra.mxu0 0.0
      %531 = vmatprep.subr.mxu0 0.0
      %532 = vmatpush2.msra.mxu0 0.0
      %533 = vmatprep.subr.mxu0 0.0
      %534 = vmatpush2.msra.mxu0 0.0
      %535 = vmatprep.subr.mxu0 0.0
      %536 = vmatpush2.msra.mxu0 0.0
      %537 = vmatprep.subr.mxu0 0.0
      %538 = vmatpush2.msra.mxu0 0.0
      %539 = vmatprep.subr.mxu0 0.0
      %540 = vmatpush2.msra.mxu0 0.0
      %541 = vmatprep.subr.mxu0 0.0
      %542 = vmatpush2.msra.mxu0 0.0
      %543 = vmatprep.subr.mxu0 0.0
      %544 = vmatpush2.msra.mxu0 0.0
      %545 = vmatprep.subr.mxu0 0.0
      %546 = vmatpush2.msra.mxu0 0.0
      %547 = vmatprep.subr.mxu0 0.0
      %548 = vmatpush2.msra.mxu0 0.0
      %549 = vmatprep.mubr.f32.mxu0 0.0
      %550 = vmatmul.mubr.f32.gmra.mxu0 %v483
      %v551 = vpop.f32.mrf.mxu0
      %v552 = vadd.f32 %v480, %v551
      %v553 = vpop.f32.mrf.mxu0
      %554 = vdwg.mxu0
      %v555 = vmax.f32 %v552, 0.0
      %v556 = vld [vmem:[%s8] sm:$0xff]
      %v557 = vld [vmem:[%s8 + $0x8] sm:$0xff]
      %v558 = vld [vmem:[%s8 + $0x10] sm:$0xff]
      %v559 = vld [vmem:[%s8 + $0x18] sm:$0xff]
      %v561 = vsel %vm367, %v555, 0
      %563 = vmatprep.subr.mxu0 0.0
      %564 = vmatpush1.msra.mxu0 0.0
      %565 = vmatprep.subr.mxu0 0.0
      %566 = vmatpush1.msra.mxu0 0.0
      %567 = vmatprep.subr.mxu0 0.0
      %568 = vmatpush1.msra.mxu0 0.0
      %569 = vmatprep.subr.mxu0 0.0
      %570 = vmatpush1.msra.mxu0 0.0
      %571 = vmatprep.subr.mxu0 0.0
      %572 = vmatpush1.msra.mxu0 0.0
      %573 = vmatprep.subr.mxu0 0.0
      %574 = vmatpush1.msra.mxu0 0.0
      %575 = vmatprep.subr.mxu0 0.0
      %576 = vmatpush1.msra.mxu0 0.0
      %577 = vmatprep.subr.mxu0 0.0
      %578 = vmatpush1.msra.mxu0 0.0
      %579 = vmatprep.subr.mxu0 0.0
      %580 = vmatpush1.msra.mxu0 0.0
      %581 = vmatprep.subr.mxu0 0.0
      %582 = vmatpush1.msra.mxu0 0.0
      %583 = vmatprep.subr.mxu0 0.0
      %584 = vmatpush1.msra.mxu0 0.0
      %585 = vmatprep.subr.mxu0 0.0
      %586 = vmatpush1.msra.mxu0 0.0
      %587 = vmatprep.subr.mxu0 0.0
      %588 = vmatpush1.msra.mxu0 %v559
      %589 = vmatprep.subr.mxu0 0.0
      %590 = vmatpush1.msra.mxu0 %v558
      %591 = vmatprep.subr.mxu0 0.0
      %592 = vmatpush1.msra.mxu0 %v557
      %593 = vmatprep.subr.mxu0 0.0
      %594 = vmatpush1.msra.mxu0 %v556
      %595 = vmatprep.subr.mxu0 0.0
      %596 = vmatpush2.msra.mxu0 0.0
      %597 = vmatprep.subr.mxu0 0.0
      %598 = vmatpush2.msra.mxu0 0.0
      %599 = vmatprep.subr.mxu0 0.0
      %600 = vmatpush2.msra.mxu0 0.0
      %601 = vmatprep.subr.mxu0 0.0
      %602 = vmatpush2.msra.mxu0 0.0
      %603 = vmatprep.subr.mxu0 0.0
      %604 = vmatpush2.msra.mxu0 0.0
      %605 = vmatprep.subr.mxu0 0.0
      %606 = vmatpush2.msra.mxu0 0.0
      %607 = vmatprep.subr.mxu0 0.0
      %608 = vmatpush2.msra.mxu0 0.0
      %609 = vmatprep.subr.mxu0 0.0
      %610 = vmatpush2.msra.mxu0 0.0
      %611 = vmatprep.subr.mxu0 0.0
      %612 = vmatpush2.msra.mxu0 0.0
      %613 = vmatprep.subr.mxu0 0.0
      %614 = vmatpush2.msra.mxu0 0.0
      %615 = vmatprep.subr.mxu0 0.0
      %616 = vmatpush2.msra.mxu0 0.0
      %617 = vmatprep.subr.mxu0 0.0
      %618 = vmatpush2.msra.mxu0 0.0
      %619 = vmatprep.subr.mxu0 0.0
      %620 = vmatpush2.msra.mxu0 0.0
      %621 = vmatprep.subr.mxu0 0.0
      %622 = vmatpush2.msra.mxu0 0.0
      %623 = vmatprep.subr.mxu0 0.0
      %624 = vmatpush2.msra.mxu0 0.0
      %625 = vmatprep.subr.mxu0 0.0
      %626 = vmatpush2.msra.mxu0 0.0
      %627 = vmatprep.mubr.f32.mxu0 0.0
      %628 = vmatmul.mubr.f32.gmra.mxu0 %v561
      %v629 = vpop.f32.mrf.mxu0
      %v630 = vadd.f32 0.0, %v629
      %v631 = vpop.f32.mrf.mxu0
      %632 = vdwg.mxu0
      %v633 = vrot.slane %v555, 4
      %v635 = vsel %vm367, %v630, 0
      %v637 = vsel %vm367, %v633, 0
      %639 = vmatprep.subr.mxu0 0.0
      %640 = vmatpush1.xpose.msra.mxu0 0.0
      %641 = vmatprep.subr.mxu0 0.0
      %642 = vmatpush1.xpose.msra.mxu0 0.0
      %643 = vmatprep.subr.mxu0 0.0
      %644 = vmatpush1.xpose.msra.mxu0 0.0
      %645 = vmatprep.subr.mxu0 0.0
      %646 = vmatpush1.xpose.msra.mxu0 0.0
      %647 = vmatprep.subr.mxu0 0.0
      %648 = vmatpush1.xpose.msra.mxu0 0.0
      %649 = vmatprep.subr.mxu0 0.0
      %650 = vmatpush1.xpose.msra.mxu0 0.0
      %651 = vmatprep.subr.mxu0 0.0
      %652 = vmatpush1.xpose.msra.mxu0 0.0
      %653 = vmatprep.subr.mxu0 0.0
      %654 = vmatpush1.xpose.msra.mxu0 0.0
      %655 = vmatprep.subr.mxu0 0.0
      %656 = vmatpush1.xpose.msra.mxu0 0.0
      %657 = vmatprep.subr.mxu0 0.0
      %658 = vmatpush1.xpose.msra.mxu0 0.0
      %659 = vmatprep.subr.mxu0 0.0
      %660 = vmatpush1.xpose.msra.mxu0 0.0
      %661 = vmatprep.subr.mxu0 0.0
      %662 = vmatpush1.xpose.msra.mxu0 0.0
      %663 = vmatprep.subr.mxu0 0.0
      %664 = vmatpush1.xpose.msra.mxu0 0.0
      %665 = vmatprep.subr.mxu0 0.0
      %666 = vmatpush1.xpose.msra.mxu0 0.0
      %667 = vmatprep.subr.mxu0 0.0
      %668 = vmatpush1.xpose.msra.mxu0 0.0
      %669 = vmatprep.subr.mxu0 0.0
      %670 = vmatpush1.xpose.msra.mxu0 %v637
      %671 = vmatprep.subr.mxu0 0.0
      %672 = vmatpush2.xpose.msra.mxu0 0.0
      %673 = vmatprep.subr.mxu0 0.0
      %674 = vmatpush2.xpose.msra.mxu0 0.0
      %675 = vmatprep.subr.mxu0 0.0
      %676 = vmatpush2.xpose.msra.mxu0 0.0
      %677 = vmatprep.subr.mxu0 0.0
      %678 = vmatpush2.xpose.msra.mxu0 0.0
      %679 = vmatprep.subr.mxu0 0.0
      %680 = vmatpush2.xpose.msra.mxu0 0.0
      %681 = vmatprep.subr.mxu0 0.0
      %682 = vmatpush2.xpose.msra.mxu0 0.0
      %683 = vmatprep.subr.mxu0 0.0
      %684 = vmatpush2.xpose.msra.mxu0 0.0
      %685 = vmatprep.subr.mxu0 0.0
      %686 = vmatpush2.xpose.msra.mxu0 0.0
      %687 = vmatprep.subr.mxu0 0.0
      %688 = vmatpush2.xpose.msra.mxu0 0.0
      %689 = vmatprep.subr.mxu0 0.0
      %690 = vmatpush2.xpose.msra.mxu0 0.0
      %691 = vmatprep.subr.mxu0 0.0
      %692 = vmatpush2.xpose.msra.mxu0 0.0
      %693 = vmatprep.subr.mxu0 0.0
      %694 = vmatpush2.xpose.msra.mxu0 0.0
      %695 = vmatprep.subr.mxu0 0.0
      %696 = vmatpush2.xpose.msra.mxu0 0.0
      %697 = vmatprep.subr.mxu0 0.0
      %698 = vmatpush2.xpose.msra.mxu0 0.0
      %699 = vmatprep.subr.mxu0 0.0
      %700 = vmatpush2.xpose.msra.mxu0 0.0
      %701 = vmatprep.subr.mxu0 0.0
      %702 = vmatpush2.xpose.msra.mxu0 0.0
      %703 = vmatprep.mubr.f32.mxu0 0.0
      %704 = vmatmul.mubr.f32.gmra.mxu0 %v635
      %v705 = vpop.f32.mrf.mxu0
      %v706 = vadd.f32 0.0, %v705
      %v707 = vpop.f32.mrf.mxu0
      %708 = vdwg.mxu0
      %vm709 = vcmask 27648
      %v710 = vsel %vm709, %v706, -inf
      %711 = vmax.xlane.f32.xlu0 %v710
      %v712 = vpop.xlane.xlu0 %711
      %v713 = vrot.slane %v710, 4
      %v714 = vmax.f32 %v710, %v713
      %v715 = vrot.slane %v714, 2
      %v716 = vmax.f32 %v714, %v715
      %v717 = vrot.slane %v716, 1
      %v718 = vmax.f32 %v716, %v717
      %v719 = vld [vmem:[%s353] sm:$0xf]
      %v720 = vld [vmem:[%s357] sm:$0x3]
      %v721 = vlaneseq
      %v722 = vshrl.u32 %v721, 7
      %v723 = vlaneseq
      %v724 = vand.u32 %v723, 127
      %v725 = vadd.f32 %v712, %v719
      %v726 = vadd.f32 %v718, %v720
      %vm727 = vcmask 3072
      %v728 = vsel %vm727, %v725, -inf
      %v729 = vrot.slane %v728, 4
      %v730 = vmax.f32 %v728, %v729
      %v731 = vrot.slane %v730, 2
      %v732 = vmax.f32 %v730, %v731
      %v733 = vrot.slane %v732, 1
      %v734 = vmax.f32 %v732, %v733
      %vm735 = vcmp.ge.f32.partialorder %v725, %v734
      %v736 = vsel %vm735, %v722, 4
      %v737 = vsel %vm727, %v736, 2147483647
      %v738 = vrot.slane %v737, 4
      %vm739 = vcmp.lt.s32.totalorder %v737, %v738
      %v740 = vsel %vm739, %v737, %v738
      %v741 = vrot.slane %v740, 2
      %vm742 = vcmp.lt.s32.totalorder %v740, %v741
      %v743 = vsel %vm742, %v740, %v741
      %v744 = vrot.slane %v743, 1
      %vm745 = vcmp.lt.s32.totalorder %v743, %v744
      %v746 = vsel %vm745, %v743, %v744
      %vm747 = vcmask 24576
      %v748 = vsel %vm747, %v726, -inf
      %749 = vmax.xlane.f32.xlu0 %v748
      %v750 = vpop.xlane.xlu0 %749
      %vm751 = vcmp.ge.f32.partialorder %v726, %v750
      %v752 = vsel %vm751, %v724, 4
      %v753 = vsel %vm747, %v752, 2147483647
      %v754 = vand.u32 %v753, 65535
      %v755 = vshra.s32 %v753, 16
      %v756 = vcvt.s32.f32 %v754
      %v757 = vcvt.s32.f32 %v755
      %758 = vmin.xlane.f32.xlu0 %v757
      %v759 = vpop.xlane.xlu0 %758
      %vm760 = vcmp.eq.f32.partialorder %v757, %v759
      %v761 = vsel %vm760, %v756, inf
      %762 = vmin.xlane.f32.xlu0 %v761
      %v763 = vpop.xlane.xlu0 %762
      %v764 = vcvt.f32.s32 %v763
      %v765 = vcvt.f32.s32 %v759
      %v766 = vshll.u32 %v765, 16
      %v767 = vadd.s32 %v766, %v764
      %vm768 = vcmp.eq.s32.totalorder %v724, 0
      %769 = vset.pattern.permute.xlu0 0
      %770 = vperm.xlu0 %769, %v746
      %v771 = vpop.permute.xlu0 %770
      %v772 = vsel %vm768, %v771, 0
      %vm773 = vcmp.eq.s32.totalorder %v724, 2
      %v774 = vlaneseq
      %v775 = vshrl.u32 %v774, 7
      %v776 = vsub.s32 0, %v775
      %v777 = vrot.slane %v767, %v776
      %v778 = vsel %vm773, %v777, %v772
      %vm779 = vcmask 11272
      %v780 = vsel %vm779, %v725, -inf
      %v781 = vrot.slane %v780, 4
      %v782 = vmax.f32 %v780, %v781
      %v783 = vrot.slane %v782, 2
      %v784 = vmax.f32 %v782, %v783
      %v785 = vrot.slane %v784, 1
      %v786 = vmax.f32 %v784, %v785
      %vm787 = vcmp.ge.f32.partialorder %v725, %v786
      %v788 = vsel %vm787, %v722, 4
      %v789 = vsel %vm779, %v788, 2147483647
      %v790 = vrot.slane %v789, 4
      %vm791 = vcmp.lt.s32.totalorder %v789, %v790
      %v792 = vsel %vm791, %v789, %v790
      %v793 = vrot.slane %v792, 2
      %vm794 = vcmp.lt.s32.totalorder %v792, %v793
      %v795 = vsel %vm794, %v792, %v793
      %v796 = vrot.slane %v795, 1
      %vm797 = vcmp.lt.s32.totalorder %v795, %v796
      %v798 = vsel %vm797, %v795, %v796
      %vm799 = vcmask 25601
      %v800 = vsel %vm799, %v726, -inf
      %801 = vmax.xlane.f32.xlu0 %v800
      %v802 = vpop.xlane.xlu0 %801
      %vm803 = vcmp.ge.f32.partialorder %v726, %v802
      %v804 = vsel %vm803, %v724, 4
      %v805 = vsel %vm799, %v804, 2147483647
      %v806 = vand.u32 %v805, 65535
      %v807 = vshra.s32 %v805, 16
      %v808 = vcvt.s32.f32 %v806
      %v809 = vcvt.s32.f32 %v807
      %810 = vmin.xlane.f32.xlu0 %v809
      %v811 = vpop.xlane.xlu0 %810
      %vm812 = vcmp.eq.f32.partialorder %v809, %v811
      %v813 = vsel %vm812, %v808, inf
      %814 = vmin.xlane.f32.xlu0 %v813
      %v815 = vpop.xlane.xlu0 %814
      %v816 = vcvt.f32.s32 %v815
      %v817 = vcvt.f32.s32 %v811
      %v818 = vshll.u32 %v817, 16
      %v819 = vadd.s32 %v818, %v816
      %vm820 = vcmp.eq.s32.totalorder %v724, 1
      %821 = vset.pattern.permute.xlu0 1
      %822 = vperm.xlu0 %821, %v798
      %v823 = vpop.permute.xlu0 %822
      %v824 = vsel %vm820, %v823, %v778
      %vm825 = vcmp.eq.s32.totalorder %v724, 3
      %v826 = vlaneseq
      %v827 = vshrl.u32 %v826, 7
      %v828 = vsub.s32 1, %v827
      %v829 = vrot.slane %v819, %v828
      %v830 = vsel %vm825, %v829, %v824
      %831 = vst [vmem:[%s361] sm:$0xff] %v830
      %p832 = scmp.lt.s32.totalorder %s20, 1
      %s833 = scalar_select %p832, %s20, 1
      %s834 = smul.addr %s833, 8
      %s835 = scalar_lea.vmem %s9, %s834
      // Predicated region
      $region57: #{mpcn_forward.2} parent=55 // pred_check
        %p836 = pneg %p242
      $region58: #{mpcn_forward.2} parent=55 // pred_check_branch
        %838 = sbr.rel (%p836) target = $region60
      $region59: #{mpcn_forward.2} parent=55 // pred_region
        _
      $region60: #{mpcn_forward.2} parent=55 // pred_fallthru
        _
    $region56: #{mpcn_forward.2} parent=5 // pred_fallthru
      _
    %p839 = scmp.le.s32.totalorder 2, %s15
    // Predicated region
    $region61: #{mpcn_forward.2} parent=5 // pred_check
      %p840 = pneg %p839
    $region62: #{mpcn_forward.2} parent=5 // pred_check_branch
      %842 = sbr.rel (%p840) target = $region64
    $region63: #{mpcn_forward.2} parent=5 // pred_region
      %s843 = ssub.s32 %s15, 2
      // Predicated region
      $region65: #{mpcn_forward.2} parent=63 // pred_check
        %p844 = pneg %p248
      $region66: #{mpcn_forward.2} parent=63 // pred_check_branch
        %846 = sbr.rel (%p844) target = $region68
      $region67: #{mpcn_forward.2} parent=63 // pred_region
        %p847 = scmp.lt.s32.totalorder %s21, 1
        %s848 = scalar_select %p847, %s21, 1
        %s849 = smul.addr %s848, 8
        %s850 = scalar_lea.vmem %s9, %s849
      $region68: #{mpcn_forward.2} parent=63 // pred_fallthru
        _
    $region64: #{mpcn_forward.2} parent=5 // pred_fallthru
      _
  $region6: #{mpcn_forward.2} parent=0 // loop_footer
    %s19 = sadd.s32 1, %s15
  $region7: #{mpcn_forward.2} parent=0 // loop_footer_branch
    %14 = sbr.rel target = $region3
  $region8: #{mpcn_forward.2} parent=0 // loop_exit
    _

// kernel: mpcn_forward.3
$region0: #{mpcn_forward.3}
  #allocation0 [shape = 'u32[]', space=smem, size = 0x4, offset = 0x4, fixed_abs, tag = 'smem constant byte address 0x4 - core index']
  #allocation1 [shape = 'u32[144,128]{1,0:T(1,128)}', space=vmem, size = 0x12000, scoped, tag = 'internal scratch']
  #allocation2 [shape = 'f32[1,1]{1,0:T(1,128)S(1)}', space=vmem, size = 0x200, scoped, tag = 'scoped memory for mpcn_forward.3']
  %s0 = inlined_call_operand.vmem [shape: bf16[2,4,8,32], index: 0, kind: input, shape index: {}]
  %s1 = inlined_call_operand.vmem [shape: bf16[32,32], index: 1, kind: input, shape index: {}]
  %s2 = inlined_call_operand.vmem [shape: f32[1,32], index: 2, kind: input, shape index: {}]
  %s3 = inlined_call_operand.vmem [shape: bf16[32,32], index: 3, kind: input, shape index: {}]
  %s4 = inlined_call_operand.vmem [shape: f32[128,8], index: 4, kind: input, shape index: {}]
  %s5 = inlined_call_operand.vmem [shape: f32[1,128], index: 5, kind: input, shape index: {}]
  %s6 = inlined_call_operand.<no memory space> [shape: f32[1,1], index: 6, kind: input, shape index: {}]
  %s7 = inlined_call_operand.vmem [shape: f32[2,8,128], index: 7, kind: output, shape index: {}]
  %s8 = sld [smem:[#allocation0]]
  $region61: #{mpcn_forward.3} parent=0
    _
  %s10 = ssub.s32 1, %s8
  %s11 = scalar_select 0, %s10, %s8
  %v12 = vstv %s6
  %13 = vst [vmem:[#allocation2] sm:$0x1] %v12
  loop: start=0, step=1, limit=4
  $region2: #{mpcn_forward.3} parent=0 // loop_pre_header
    _
  $region3: #{mpcn_forward.3} parent=0 // loop_header
    %s15 = sphi 0, %s19
    %p16 = scmp.ge.s32.totalorder %s15, 4
    %s25 = sphi 0, %s27
    %s28 = sphi 0, %s25
    %s29 = sphi 0, %s28
    %s45 = sphi 0, %s29
    %s49 = sphi 0, %s49
    %s51 = sphi 0, %s49
    %s52 = sphi 0, %s51
    %s66 = sphi 0, %s52
    %s70 = sphi 0, %s70
    %s72 = sphi 0, %s70
    %s73 = sphi 0, %s72
    %s87 = sphi 0, %s73
    %s91 = sphi 0, %s91
    %s93 = sphi 0, %s91
    %s94 = sphi 0, %s93
    %s108 = sphi 0, %s94
    %s112 = sphi 0, %s112
    %s114 = sphi 0, %s112
    %s115 = sphi 0, %s114
    %s129 = sphi 0, %s115
    %s133 = sphi 0, %s133
    %s135 = sphi 0, %s133
    %s136 = sphi 0, %s135
    %s150 = sphi 0, %s136
    %s154 = sphi 0, %s154
    %s156 = sphi 0, %s154
    %s157 = sphi 0, %s156
    %s171 = sphi 0, %s157
    %s177 = sphi 0, %s179
    %s180 = sphi 0, %s177
    %s181 = sphi 0, %s180
    %s197 = sphi 0, %s181
  $region4: #{mpcn_forward.3} parent=0 // loop_header_branch
    %18 = sbr.rel (%p16) target = $region8
  $region5: #{mpcn_forward.3} parent=0 // loop_body
    %s20 = ssub.s32 %s15, 1
    %s21 = ssub.s32 %s15, 2
    %s22 = sadd.s32 %s15, 1
    %s23 = ssub.s32 %s15, %s22
    %p24 = scmp.eq.s32.totalorder %s23, 0
    %s26 = sadd.s32 %s25, 1
    %s27 = scalar_select %p24, %s25, %s26
    %p30 = pneg %p24
    %p31 = scmp.eq.s32.totalorder %s15, 1
    %p32 = por %p30, %p31
    %p33 = scmp.ne.s32.totalorder %s25, %s28
    %p34 = scmp.eq.s32.totalorder %s15, 0
    %p35 = por %p33, %p34
    %p36 = scmp.ne.s32.totalorder %s25, %s28
    %p37 = scmp.eq.s32.totalorder %s20, 1
    %p38 = por %p36, %p37
    %p39 = scmp.ne.s32.totalorder %s28, %s29
    %p40 = scmp.eq.s32.totalorder %s20, 0
    %p41 = por %p39, %p40
    %p42 = scmp.ne.s32.totalorder %s28, %s29
    %p43 = scmp.eq.s32.totalorder %s21, 1
    %p44 = por %p42, %p43
    %p46 = scmp.ne.s32.totalorder %s29, %s45
    %p47 = scmp.eq.s32.totalorder %s21, 0
    %p48 = por %p46, %p47
    %s50 = sadd.s32 %s49, 1
    %p53 = scmp.eq.s32.totalorder %s15, 1
    %p54 = scmp.ne.s32.totalorder %s49, %s51
    %p55 = scmp.eq.s32.totalorder %s15, 0
    %p56 = por %p54, %p55
    %p57 = scmp.ne.s32.totalorder %s49, %s51
    %p58 = scmp.eq.s32.totalorder %s20, 1
    %p59 = por %p57, %p58
    %p60 = scmp.ne.s32.totalorder %s51, %s52
    %p61 = scmp.eq.s32.totalorder %s20, 0
    %p62 = por %p60, %p61
    %p63 = scmp.ne.s32.totalorder %s51, %s52
    %p64 = scmp.eq.s32.totalorder %s21, 1
    %p65 = por %p63, %p64
    %p67 = scmp.ne.s32.totalorder %s52, %s66
    %p68 = scmp.eq.s32.totalorder %s21, 0
    %p69 = por %p67, %p68
    %s71 = sadd.s32 %s70, 1
    %p74 = scmp.eq.s32.totalorder %s15, 1
    %p75 = scmp.ne.s32.totalorder %s70, %s72
    %p76 = scmp.eq.s32.totalorder %s15, 0
    %p77 = por %p75, %p76
    %p78 = scmp.ne.s32.totalorder %s70, %s72
    %p79 = scmp.eq.s32.totalorder %s20, 1
    %p80 = por %p78, %p79
    %p81 = scmp.ne.s32.totalorder %s72, %s73
    %p82 = scmp.eq.s32.totalorder %s20, 0
    %p83 = por %p81, %p82
    %p84 = scmp.ne.s32.totalorder %s72, %s73
    %p85 = scmp.eq.s32.totalorder %s21, 1
    %p86 = por %p84, %p85
    %p88 = scmp.ne.s32.totalorder %s73, %s87
    %p89 = scmp.eq.s32.totalorder %s21, 0
    %p90 = por %p88, %p89
    %s92 = sadd.s32 %s91, 1
    %p95 = scmp.eq.s32.totalorder %s15, 1
    %p96 = scmp.ne.s32.totalorder %s91, %s93
    %p97 = scmp.eq.s32.totalorder %s15, 0
    %p98 = por %p96, %p97
    %p99 = scmp.ne.s32.totalorder %s91, %s93
    %p100 = scmp.eq.s32.totalorder %s20, 1
    %p101 = por %p99, %p100
    %p102 = scmp.ne.s32.totalorder %s93, %s94
    %p103 = scmp.eq.s32.totalorder %s20, 0
    %p104 = por %p102, %p103
    %p105 = scmp.ne.s32.totalorder %s93, %s94
    %p106 = scmp.eq.s32.totalorder %s21, 1
    %p107 = por %p105, %p106
    %p109 = scmp.ne.s32.totalorder %s94, %s108
    %p110 = scmp.eq.s32.totalorder %s21, 0
    %p111 = por %p109, %p110
    %s113 = sadd.s32 %s112, 1
    %p116 = scmp.eq.s32.totalorder %s15, 1
    %p117 = scmp.ne.s32.totalorder %s112, %s114
    %p118 = scmp.eq.s32.totalorder %s15, 0
    %p119 = por %p117, %p118
    %p120 = scmp.ne.s32.totalorder %s112, %s114
    %p121 = scmp.eq.s32.totalorder %s20, 1
    %p122 = por %p120, %p121
    %p123 = scmp.ne.s32.totalorder %s114, %s115
    %p124 = scmp.eq.s32.totalorder %s20, 0
    %p125 = por %p123, %p124
    %p126 = scmp.ne.s32.totalorder %s114, %s115
    %p127 = scmp.eq.s32.totalorder %s21, 1
    %p128 = por %p126, %p127
    %p130 = scmp.ne.s32.totalorder %s115, %s129
    %p131 = scmp.eq.s32.totalorder %s21, 0
    %p132 = por %p130, %p131
    %s134 = sadd.s32 %s133, 1
    %p137 = scmp.eq.s32.totalorder %s15, 1
    %p138 = scmp.ne.s32.totalorder %s133, %s135
    %p139 = scmp.eq.s32.totalorder %s15, 0
    %p140 = por %p138, %p139
    %p141 = scmp.ne.s32.totalorder %s133, %s135
    %p142 = scmp.eq.s32.totalorder %s20, 1
    %p143 = por %p141, %p142
    %p144 = scmp.ne.s32.totalorder %s135, %s136
    %p145 = scmp.eq.s32.totalorder %s20, 0
    %p146 = por %p144, %p145
    %p147 = scmp.ne.s32.totalorder %s135, %s136
    %p148 = scmp.eq.s32.totalorder %s21, 1
    %p149 = por %p147, %p148
    %p151 = scmp.ne.s32.totalorder %s136, %s150
    %p152 = scmp.eq.s32.totalorder %s21, 0
    %p153 = por %p151, %p152
    %s155 = sadd.s32 %s154, 1
    %p158 = scmp.eq.s32.totalorder %s15, 1
    %p159 = scmp.ne.s32.totalorder %s154, %s156
    %p160 = scmp.eq.s32.totalorder %s15, 0
    %p161 = por %p159, %p160
    %p162 = scmp.ne.s32.totalorder %s154, %s156
    %p163 = scmp.eq.s32.totalorder %s20, 1
    %p164 = por %p162, %p163
    %p165 = scmp.ne.s32.totalorder %s156, %s157
    %p166 = scmp.eq.s32.totalorder %s20, 0
    %p167 = por %p165, %p166
    %p168 = scmp.ne.s32.totalorder %s156, %s157
    %p169 = scmp.eq.s32.totalorder %s21, 1
    %p170 = por %p168, %p169
    %p172 = scmp.ne.s32.totalorder %s157, %s171
    %p173 = scmp.eq.s32.totalorder %s21, 0
    %p174 = por %p172, %p173
    %s175 = ssub.s32 %s15, %s22
    %p176 = scmp.eq.s32.totalorder %s175, 0
    %s178 = sadd.s32 %s177, 1
    %s179 = scalar_select %p176, %s177, %s178
    %p182 = pneg %p176
    %p183 = scmp.eq.s32.totalorder %s15, 1
    %p184 = por %p182, %p183
    %p185 = scmp.ne.s32.totalorder %s177, %s180
    %p186 = scmp.eq.s32.totalorder %s15, 0
    %p187 = por %p185, %p186
    %p188 = scmp.ne.s32.totalorder %s177, %s180
    %p189 = scmp.eq.s32.totalorder %s20, 1
    %p190 = por %p188, %p189
    %p191 = scmp.ne.s32.totalorder %s180, %s181
    %p192 = scmp.eq.s32.totalorder %s20, 0
    %p193 = por %p191, %p192
    %p194 = scmp.ne.s32.totalorder %s180, %s181
    %p195 = scmp.eq.s32.totalorder %s21, 1
    %p196 = por %p194, %p195
    %p198 = scmp.ne.s32.totalorder %s181, %s197
    %p199 = scmp.eq.s32.totalorder %s21, 0
    %p200 = por %p198, %p199
    %p201 = scmp.le.s32.totalorder 1, %s15
    %p202 = scmp.lt.s32.totalorder %s15, 3
    %p203 = pnand %p201, %p202
    %p204 = pneg %p203
    // Predicated region
    $region9: #{mpcn_forward.3} parent=5 // pred_check
      _
    $region10: #{mpcn_forward.3} parent=5 // pred_check_branch
      %206 = sbr.rel (%p203) target = $region12
    $region11: #{mpcn_forward.3} parent=5 // pred_region
      %s207 = ssub.s32 %s15, 1
      // Predicated region
      $region13: #{mpcn_forward.3} parent=11 // pred_check
        %p208 = pneg %p62
      $region14: #{mpcn_forward.3} parent=11 // pred_check_branch
        %210 = sbr.rel (%p208) target = $region16
      $region15: #{mpcn_forward.3} parent=11 // pred_region
        _
      $region16: #{mpcn_forward.3} parent=11 // pred_fallthru
        _
      // Predicated region
      $region17: #{mpcn_forward.3} parent=11 // pred_check
        %p211 = pneg %p83
      $region18: #{mpcn_forward.3} parent=11 // pred_check_branch
        %213 = sbr.rel (%p211) target = $region20
      $region19: #{mpcn_forward.3} parent=11 // pred_region
        _
      $region20: #{mpcn_forward.3} parent=11 // pred_fallthru
        _
      // Predicated region
      $region21: #{mpcn_forward.3} parent=11 // pred_check
        %p214 = pneg %p104
      $region22: #{mpcn_forward.3} parent=11 // pred_check_branch
        %216 = sbr.rel (%p214) target = $region24
      $region23: #{mpcn_forward.3} parent=11 // pred_region
        _
      $region24: #{mpcn_forward.3} parent=11 // pred_fallthru
        _
      // Predicated region
      $region25: #{mpcn_forward.3} parent=11 // pred_check
        %p217 = pneg %p125
      $region26: #{mpcn_forward.3} parent=11 // pred_check_branch
        %219 = sbr.rel (%p217) target = $region28
      $region27: #{mpcn_forward.3} parent=11 // pred_region
        _
      $region28: #{mpcn_forward.3} parent=11 // pred_fallthru
        _
      // Predicated region
      $region29: #{mpcn_forward.3} parent=11 // pred_check
        %p220 = pneg %p146
      $region30: #{mpcn_forward.3} parent=11 // pred_check_branch
        %222 = sbr.rel (%p220) target = $region32
      $region31: #{mpcn_forward.3} parent=11 // pred_region
        _
      $region32: #{mpcn_forward.3} parent=11 // pred_fallthru
        _
      // Predicated region
      $region33: #{mpcn_forward.3} parent=11 // pred_check
        %p223 = pneg %p167
      $region34: #{mpcn_forward.3} parent=11 // pred_check_branch
        %225 = sbr.rel (%p223) target = $region36
      $region35: #{mpcn_forward.3} parent=11 // pred_region
        _
      $region36: #{mpcn_forward.3} parent=11 // pred_fallthru
        _
    $region12: #{mpcn_forward.3} parent=5 // pred_fallthru
      _
    %p226 = scmp.lt.s32.totalorder %s15, 2
    // Predicated region
    $region37: #{mpcn_forward.3} parent=5 // pred_check
      %p227 = pneg %p226
    $region38: #{mpcn_forward.3} parent=5 // pred_check_branch
      %229 = sbr.rel (%p227) target = $region40
    $region39: #{mpcn_forward.3} parent=5 // pred_region
      // Predicated region
      $region41: #{mpcn_forward.3} parent=39 // pred_check
        %p230 = pneg %p35
      $region42: #{mpcn_forward.3} parent=39 // pred_check_branch
        %232 = sbr.rel (%p230) target = $region44
      $region43: #{mpcn_forward.3} parent=39 // pred_region
        %p233 = scmp.lt.s32.totalorder %s15, 1
        %s234 = scalar_select %p233, %s15, 1
        %s235 = smul.addr %s234, 4
        %s236 = smul.addr %s235, 4
        %s237 = scalar_lea.vmem %s0, %s236
      $region44: #{mpcn_forward.3} parent=39 // pred_fallthru
        _
    $region40: #{mpcn_forward.3} parent=5 // pred_fallthru
      _
    %p238 = scmp.le.s32.totalorder 1, %s15
    %p239 = scmp.lt.s32.totalorder %s15, 3
    %p240 = pnand %p238, %p239
    %p241 = pneg %p240
    // Predicated region
    $region45: #{mpcn_forward.3} parent=5 // pred_check
      _
    $region46: #{mpcn_forward.3} parent=5 // pred_check_branch
      %243 = sbr.rel (%p240) target = $region48
    $region47: #{mpcn_forward.3} parent=5 // pred_region
      %s244 = ssub.s32 %s15, 1
      %p245 = scmp.lt.s32.totalorder %s20, 1
      %s246 = scalar_select %p245, %s20, 1
      %s247 = smul.addr %s246, 4
      %s248 = smul.addr %s247, 4
      %s249 = scalar_lea.vmem %s0, %s248
      %p250 = pneg %p41
      %p251 = pneg %p38
      %p252 = pneg %p62
      %p253 = pneg %p59
      %p254 = pneg %p83
      %p255 = pneg %p80
      %p256 = pneg %p104
      %p257 = pneg %p101
      %p258 = pneg %p125
      %p259 = pneg %p122
      %p260 = pneg %p146
      %p261 = pneg %p143
      %p262 = pneg %p167
      %p263 = pneg %p164
      %p264 = pneg %p193
      %p265 = pneg %p190
      %p266 = scmp.lt.s32.totalorder %s20, 1
      %s267 = scalar_select %p266, %s20, 1
      %s268 = smul.addr %s267, 8
      %s269 = scalar_lea.vmem %s7, %s268
      %p270 = scmp.lt.s32.totalorder %s20, 1
      %s271 = scalar_select %p270, %s20, 1
      %s272 = smul.addr %s271, 4
      %s273 = smul.addr %s272, 4
      %s274 = scalar_lea.vmem %s0, %s273
      %p275 = scmp.lt.s32.totalorder %s20, 1
      %s276 = scalar_select %p275, %s20, 1
      %s277 = smul.addr %s276, 8
      %s278 = scalar_lea.vmem %s7, %s277
      %v280 = vld [vmem:[%s274] sm:$0xf]
      %v281 = vld [vmem:[%s274 + $0x4] sm:$0xf]
      %v282 = vld [vmem:[%s274 + $0x8] sm:$0xf]
      %v283 = vld [vmem:[%s274 + $0xc] sm:$0xf]
      %v284 = vld [vmem:[%s1] sm:$0xf]
      %v285 = vld [vmem:[%s1 + $0x4] sm:$0xf]
      %v286 = vld [vmem:[%s1 + $0x8] sm:$0xf]
      %v287 = vld [vmem:[%s1 + $0xc] sm:$0xf]
      %v288 = vld [vmem:[%s2] sm:$0x1]
      %v290 = vlaneseq
      %v291 = vshrl.u32 %v290, 7
      %v292 = vsub.s32 0, %v291
      %v293 = vrot.slane %v288, %v292
      %v299 = vunpack.c.l.b16 %v280
      %v300 = vunpack.c.l.b16 %v281
      %v301 = vunpack.c.l.b16 %v282
      %v302 = vunpack.c.l.b16 %v283
      %v303 = vpack.c.b16 %v300, %v299
      %v304 = vpack.c.b16 %v302, %v301
      %v309 = vunpack.c.l.b16 %v284
      %v310 = vunpack.c.l.b16 %v285
      %v311 = vunpack.c.l.b16 %v286
      %v312 = vunpack.c.l.b16 %v287
      %v313 = vpack.c.b16 %v310, %v309
      %v314 = vpack.c.b16 %v312, %v311
      %vm317 = vcmask 261120
      %v319 = vsel %vm317, %v303, 0
      %v322 = vsel %vm317, %v304, 0
      %324 = vmatprep.subr.bf16.mxu0 0
      %325 = vmatpush1.bf16.msra.mxu0 0
      %326 = vmatprep.subr.bf16.mxu0 0
      %327 = vmatpush1.bf16.msra.mxu0 0
      %328 = vmatprep.subr.bf16.mxu0 0
      %329 = vmatpush1.bf16.msra.mxu0 0
      %330 = vmatprep.subr.bf16.mxu0 0
      %331 = vmatpush1.bf16.msra.mxu0 0
      %332 = vmatprep.subr.bf16.mxu0 0
      %333 = vmatpush1.bf16.msra.mxu0 0
      %334 = vmatprep.subr.bf16.mxu0 0
      %335 = vmatpush1.bf16.msra.mxu0 0
      %336 = vmatprep.subr.bf16.mxu0 0
      %337 = vmatpush1.bf16.msra.mxu0 %v314
      %338 = vmatprep.subr.bf16.mxu0 0
      %339 = vmatpush1.bf16.msra.mxu0 %v313
      %340 = vmatprep.subr.bf16.mxu0 0
      %341 = vmatpush2.bf16.msra.mxu0 0
      %342 = vmatprep.subr.bf16.mxu0 0
      %343 = vmatpush2.bf16.msra.mxu0 0
      %344 = vmatprep.subr.bf16.mxu0 0
      %345 = vmatpush2.bf16.msra.mxu0 0
      %346 = vmatprep.subr.bf16.mxu0 0
      %347 = vmatpush2.bf16.msra.mxu0 0
      %348 = vmatprep.subr.bf16.mxu0 0
      %349 = vmatpush2.bf16.msra.mxu0 0
      %350 = vmatprep.subr.bf16.mxu0 0
      %351 = vmatpush2.bf16.msra.mxu0 0
      %352 = vmatprep.subr.bf16.mxu0 0
      %353 = vmatpush2.bf16.msra.mxu0 0
      %354 = vmatprep.subr.bf16.mxu0 0
      %355 = vmatpush2.bf16.msra.mxu0 0
      %356 = vmatprep.mubr.bf16.mxu0 0
      %357 = vmatmul.mubr.bf16.gmra.mxu0 %v319
      %v358 = vpop.f32.mrf.mxu0
      %v359 = vadd.f32 %v293, %v358
      %v360 = vpop.f32.mrf.mxu0
      %v361 = vpop.f32.mrf.mxu0
      %v362 = vadd.f32 %v293, %v361
      %v363 = vpop.f32.mrf.mxu0
      %364 = vmatprep.mubr.bf16.mxu0 0
      %365 = vmatmul.mubr.bf16.gmra.mxu0 %v322
      %v366 = vpop.f32.mrf.mxu0
      %v367 = vadd.f32 %v293, %v366
      %v368 = vpop.f32.mrf.mxu0
      %v369 = vpop.f32.mrf.mxu0
      %v370 = vadd.f32 %v293, %v369
      %v371 = vpop.f32.mrf.mxu0
      %372 = vdwg.mxu0
      %v373 = vmax.f32 %v359, 0.0
      %v374 = vmax.f32 %v362, 0.0
      %v375 = vmax.f32 %v367, 0.0
      %v376 = vmax.f32 %v370, 0.0
      %v377 = vpack.c.bf16 %v374, %v373
      %v378 = vld [vmem:[%s3] sm:$0xf]
      %v379 = vld [vmem:[%s3 + $0x4] sm:$0xf]
      %v380 = vld [vmem:[%s3 + $0x8] sm:$0xf]
      %v381 = vld [vmem:[%s3 + $0xc] sm:$0xf]
      %v386 = vunpack.c.l.b16 %v378
      %v387 = vunpack.c.l.b16 %v379
      %v388 = vunpack.c.l.b16 %v380
      %v389 = vunpack.c.l.b16 %v381
      %v390 = vpack.c.b16 %v387, %v386
      %v391 = vpack.c.b16 %v389, %v388
      %v395 = vsel %vm317, %v377, 0
      %397 = vmatprep.subr.bf16.mxu0 0
      %398 = vmatpush1.bf16.msra.mxu0 0
      %399 = vmatprep.subr.bf16.mxu0 0
      %400 = vmatpush1.bf16.msra.mxu0 0
      %401 = vmatprep.subr.bf16.mxu0 0
      %402 = vmatpush1.bf16.msra.mxu0 0
      %403 = vmatprep.subr.bf16.mxu0 0
      %404 = vmatpush1.bf16.msra.mxu0 0
      %405 = vmatprep.subr.bf16.mxu0 0
      %406 = vmatpush1.bf16.msra.mxu0 0
      %407 = vmatprep.subr.bf16.mxu0 0
      %408 = vmatpush1.bf16.msra.mxu0 0
      %409 = vmatprep.subr.bf16.mxu0 0
      %410 = vmatpush1.bf16.msra.mxu0 %v391
      %411 = vmatprep.subr.bf16.mxu0 0
      %412 = vmatpush1.bf16.msra.mxu0 %v390
      %413 = vmatprep.subr.bf16.mxu0 0
      %414 = vmatpush2.bf16.msra.mxu0 0
      %415 = vmatprep.subr.bf16.mxu0 0
      %416 = vmatpush2.bf16.msra.mxu0 0
      %417 = vmatprep.subr.bf16.mxu0 0
      %418 = vmatpush2.bf16.msra.mxu0 0
      %419 = vmatprep.subr.bf16.mxu0 0
      %420 = vmatpush2.bf16.msra.mxu0 0
      %421 = vmatprep.subr.bf16.mxu0 0
      %422 = vmatpush2.bf16.msra.mxu0 0
      %423 = vmatprep.subr.bf16.mxu0 0
      %424 = vmatpush2.bf16.msra.mxu0 0
      %425 = vmatprep.subr.bf16.mxu0 0
      %426 = vmatpush2.bf16.msra.mxu0 0
      %427 = vmatprep.subr.bf16.mxu0 0
      %428 = vmatpush2.bf16.msra.mxu0 0
      %429 = vmatprep.mubr.bf16.mxu0 0
      %430 = vmatmul.mubr.bf16.gmra.mxu0 %v395
      %v431 = vpop.f32.mrf.mxu0
      %v432 = vadd.f32 0.0, %v431
      %v433 = vpop.f32.mrf.mxu0
      %v434 = vpop.f32.mrf.mxu0
      %v435 = vadd.f32 0.0, %v434
      %v436 = vpop.f32.mrf.mxu0
      %437 = vdwg.mxu0
      %v438 = vunpack.c.l.bf16 %v280
      %v439 = vunpack.c.l.bf16 %v282
      %v440 = vsel %vm317, %v375, 0.0
      %v441 = vrot.slane %v440, 4
      %v442 = vadd.f32 %v440, %v441
      %v443 = vrot.slane %v442, 2
      %v444 = vadd.f32 %v442, %v443
      %v445 = vrot.slane %v444, 1
      %v446 = vadd.f32 %v444, %v445
      %v447 = vrcp.pop 8.0
      %v448 = vmul.f32 %v446, %v447
      %v449 = vsel %vm317, %v432, 0.0
      %v450 = vrot.slane %v449, 4
      %v451 = vadd.f32 %v449, %v450
      %v452 = vrot.slane %v451, 2
      %v453 = vadd.f32 %v451, %v452
      %v454 = vrot.slane %v453, 1
      %v455 = vadd.f32 %v453, %v454
      %v456 = vmul.f32 %v455, %v447
      %v458 = vsel %vm317, %v448, 0
      %v461 = vsel %vm317, %v432, 0
      %463 = vmatprep.subr.mxu0 0.0
      %464 = vmatpush1.xpose.msra.mxu0 0.0
      %465 = vmatprep.subr.mxu0 0.0
      %466 = vmatpush1.xpose.msra.mxu0 0.0
      %467 = vmatprep.subr.mxu0 0.0
      %468 = vmatpush1.xpose.msra.mxu0 0.0
      %469 = vmatprep.subr.mxu0 0.0
      %470 = vmatpush1.xpose.msra.mxu0 0.0
      %471 = vmatprep.subr.mxu0 0.0
      %472 = vmatpush1.xpose.msra.mxu0 0.0
      %473 = vmatprep.subr.mxu0 0.0
      %474 = vmatpush1.xpose.msra.mxu0 0.0
      %475 = vmatprep.subr.mxu0 0.0
      %476 = vmatpush1.xpose.msra.mxu0 0.0
      %477 = vmatprep.subr.mxu0 0.0
      %478 = vmatpush1.xpose.msra.mxu0 0.0
      %479 = vmatprep.subr.mxu0 0.0
      %480 = vmatpush1.xpose.msra.mxu0 0.0
      %481 = vmatprep.subr.mxu0 0.0
      %482 = vmatpush1.xpose.msra.mxu0 0.0
      %483 = vmatprep.subr.mxu0 0.0
      %484 = vmatpush1.xpose.msra.mxu0 0.0
      %485 = vmatprep.subr.mxu0 0.0
      %486 = vmatpush1.xpose.msra.mxu0 0.0
      %487 = vmatprep.subr.mxu0 0.0
      %488 = vmatpush1.xpose.msra.mxu0 0.0
      %489 = vmatprep.subr.mxu0 0.0
      %490 = vmatpush1.xpose.msra.mxu0 0.0
      %491 = vmatprep.subr.mxu0 0.0
      %492 = vmatpush1.xpose.msra.mxu0 0.0
      %493 = vmatprep.subr.mxu0 0.0
      %494 = vmatpush1.xpose.msra.mxu0 %v461
      %495 = vmatprep.subr.mxu0 0.0
      %496 = vmatpush2.xpose.msra.mxu0 0.0
      %497 = vmatprep.subr.mxu0 0.0
      %498 = vmatpush2.xpose.msra.mxu0 0.0
      %499 = vmatprep.subr.mxu0 0.0
      %500 = vmatpush2.xpose.msra.mxu0 0.0
      %501 = vmatprep.subr.mxu0 0.0
      %502 = vmatpush2.xpose.msra.mxu0 0.0
      %503 = vmatprep.subr.mxu0 0.0
      %504 = vmatpush2.xpose.msra.mxu0 0.0
      %505 = vmatprep.subr.mxu0 0.0
      %506 = vmatpush2.xpose.msra.mxu0 0.0
      %507 = vmatprep.subr.mxu0 0.0
      %508 = vmatpush2.xpose.msra.mxu0 0.0
      %509 = vmatprep.subr.mxu0 0.0
      %510 = vmatpush2.xpose.msra.mxu0 0.0
      %511 = vmatprep.subr.mxu0 0.0
      %512 = vmatpush2.xpose.msra.mxu0 0.0
      %513 = vmatprep.subr.mxu0 0.0
      %514 = vmatpush2.xpose.msra.mxu0 0.0
      %515 = vmatprep.subr.mxu0 0.0
      %516 = vmatpush2.xpose.msra.mxu0 0.0
      %517 = vmatprep.subr.mxu0 0.0
      %518 = vmatpush2.xpose.msra.mxu0 0.0
      %519 = vmatprep.subr.mxu0 0.0
      %520 = vmatpush2.xpose.msra.mxu0 0.0
      %521 = vmatprep.subr.mxu0 0.0
      %522 = vmatpush2.xpose.msra.mxu0 0.0
      %523 = vmatprep.subr.mxu0 0.0
      %524 = vmatpush2.xpose.msra.mxu0 0.0
      %525 = vmatprep.subr.mxu0 0.0
      %526 = vmatpush2.xpose.msra.mxu0 0.0
      %527 = vmatprep.mubr.f32.mxu0 0.0
      %528 = vmatmul.mubr.f32.gmra.mxu0 %v458
      %v529 = vpop.f32.mrf.mxu0
      %v530 = vadd.f32 0.0, %v529
      %v531 = vpop.f32.mrf.mxu0
      %532 = vdwg.mxu0
      %v534 = vsel %vm317, %v456, 0
      %v537 = vsel %vm317, %v375, 0
      %539 = vmatprep.subr.mxu0 0.0
      %540 = vmatpush1.xpose.msra.mxu0 0.0
      %541 = vmatprep.subr.mxu0 0.0
      %542 = vmatpush1.xpose.msra.mxu0 0.0
      %543 = vmatprep.subr.mxu0 0.0
      %544 = vmatpush1.xpose.msra.mxu0 0.0
      %545 = vmatprep.subr.mxu0 0.0
      %546 = vmatpush1.xpose.msra.mxu0 0.0
      %547 = vmatprep.subr.mxu0 0.0
      %548 = vmatpush1.xpose.msra.mxu0 0.0
      %549 = vmatprep.subr.mxu0 0.0
      %550 = vmatpush1.xpose.msra.mxu0 0.0
      %551 = vmatprep.subr.mxu0 0.0
      %552 = vmatpush1.xpose.msra.mxu0 0.0
      %553 = vmatprep.subr.mxu0 0.0
      %554 = vmatpush1.xpose.msra.mxu0 0.0
      %555 = vmatprep.subr.mxu0 0.0
      %556 = vmatpush1.xpose.msra.mxu0 0.0
      %557 = vmatprep.subr.mxu0 0.0
      %558 = vmatpush1.xpose.msra.mxu0 0.0
      %559 = vmatprep.subr.mxu0 0.0
      %560 = vmatpush1.xpose.msra.mxu0 0.0
      %561 = vmatprep.subr.mxu0 0.0
      %562 = vmatpush1.xpose.msra.mxu0 0.0
      %563 = vmatprep.subr.mxu0 0.0
      %564 = vmatpush1.xpose.msra.mxu0 0.0
      %565 = vmatprep.subr.mxu0 0.0
      %566 = vmatpush1.xpose.msra.mxu0 0.0
      %567 = vmatprep.subr.mxu0 0.0
      %568 = vmatpush1.xpose.msra.mxu0 0.0
      %569 = vmatprep.subr.mxu0 0.0
      %570 = vmatpush1.xpose.msra.mxu0 %v537
      %571 = vmatprep.subr.mxu0 0.0
      %572 = vmatpush2.xpose.msra.mxu0 0.0
      %573 = vmatprep.subr.mxu0 0.0
      %574 = vmatpush2.xpose.msra.mxu0 0.0
      %575 = vmatprep.subr.mxu0 0.0
      %576 = vmatpush2.xpose.msra.mxu0 0.0
      %577 = vmatprep.subr.mxu0 0.0
      %578 = vmatpush2.xpose.msra.mxu0 0.0
      %579 = vmatprep.subr.mxu0 0.0
      %580 = vmatpush2.xpose.msra.mxu0 0.0
      %581 = vmatprep.subr.mxu0 0.0
      %582 = vmatpush2.xpose.msra.mxu0 0.0
      %583 = vmatprep.subr.mxu0 0.0
      %584 = vmatpush2.xpose.msra.mxu0 0.0
      %585 = vmatprep.subr.mxu0 0.0
      %586 = vmatpush2.xpose.msra.mxu0 0.0
      %587 = vmatprep.subr.mxu0 0.0
      %588 = vmatpush2.xpose.msra.mxu0 0.0
      %589 = vmatprep.subr.mxu0 0.0
      %590 = vmatpush2.xpose.msra.mxu0 0.0
      %591 = vmatprep.subr.mxu0 0.0
      %592 = vmatpush2.xpose.msra.mxu0 0.0
      %593 = vmatprep.subr.mxu0 0.0
      %594 = vmatpush2.xpose.msra.mxu0 0.0
      %595 = vmatprep.subr.mxu0 0.0
      %596 = vmatpush2.xpose.msra.mxu0 0.0
      %597 = vmatprep.subr.mxu0 0.0
      %598 = vmatpush2.xpose.msra.mxu0 0.0
      %599 = vmatprep.subr.mxu0 0.0
      %600 = vmatpush2.xpose.msra.mxu0 0.0
      %601 = vmatprep.subr.mxu0 0.0
      %602 = vmatpush2.xpose.msra.mxu0 0.0
      %603 = vmatprep.mubr.f32.mxu0 0.0
      %604 = vmatmul.mubr.f32.gmra.mxu0 %v534
      %v605 = vpop.f32.mrf.mxu0
      %v606 = vadd.f32 0.0, %v605
      %v607 = vpop.f32.mrf.mxu0
      %608 = vdwg.mxu0
      %vm609 = vcmask 57344
      %v610 = vsel %vm609, %v530, -inf
      %611 = vmax.xlane.f32.xlu0 %v610
      %v612 = vpop.xlane.xlu0 %611
      %v613 = vsub.f32 %v530, %v612
      %v614 = vmul.f32 %v613, 1.442695
      %v615 = vpow.pop %v614
      %v616 = vsel %vm609, %v615, 0.0
      %617 = vadd.xlane.f32.xlu0 %v616
      %v618 = vpop.xlane.xlu0 %617
      %v619 = vrcp.pop %v618
      %v620 = vmul.f32 %v615, %v619
      %v621 = vsel %vm609, %v606, -inf
      %622 = vmax.xlane.f32.xlu0 %v621
      %v623 = vpop.xlane.xlu0 %622
      %v624 = vsub.f32 %v606, %v623
      %v625 = vmul.f32 %v624, 1.442695
      %v626 = vpow.pop %v625
      %v627 = vsel %vm609, %v626, 0.0
      %628 = vadd.xlane.f32.xlu0 %v627
      %v629 = vpop.xlane.xlu0 %628
      %v630 = vrcp.pop %v629
      %v631 = vmul.f32 %v626, %v630
      %vm632 = vcmask 64512
      %v634 = vsel %vm632, %v620, 0
      %636 = vmatprep.subr.mxu0 0.0
      %637 = vmatpush1.msra.mxu0 0.0
      %638 = vmatprep.subr.mxu0 0.0
      %639 = vmatpush1.msra.mxu0 0.0
      %640 = vmatprep.subr.mxu0 0.0
      %641 = vmatpush1.msra.mxu0 0.0
      %642 = vmatprep.subr.mxu0 0.0
      %643 = vmatpush1.msra.mxu0 0.0
      %644 = vmatprep.subr.mxu0 0.0
      %645 = vmatpush1.msra.mxu0 0.0
      %646 = vmatprep.subr.mxu0 0.0
      %647 = vmatpush1.msra.mxu0 0.0
      %648 = vmatprep.subr.mxu0 0.0
      %649 = vmatpush1.msra.mxu0 0.0
      %650 = vmatprep.subr.mxu0 0.0
      %651 = vmatpush1.msra.mxu0 0.0
      %652 = vmatprep.subr.mxu0 0.0
      %653 = vmatpush1.msra.mxu0 0.0
      %654 = vmatprep.subr.mxu0 0.0
      %655 = vmatpush1.msra.mxu0 0.0
      %656 = vmatprep.subr.mxu0 0.0
      %657 = vmatpush1.msra.mxu0 0.0
      %658 = vmatprep.subr.mxu0 0.0
      %659 = vmatpush1.msra.mxu0 0.0
      %660 = vmatprep.subr.mxu0 0.0
      %661 = vmatpush1.msra.mxu0 0.0
      %662 = vmatprep.subr.mxu0 0.0
      %663 = vmatpush1.msra.mxu0 0.0
      %664 = vmatprep.subr.mxu0 0.0
      %665 = vmatpush1.msra.mxu0 0.0
      %666 = vmatprep.subr.mxu0 0.0
      %667 = vmatpush1.msra.mxu0 %v438
      %668 = vmatprep.subr.mxu0 0.0
      %669 = vmatpush2.msra.mxu0 0.0
      %670 = vmatprep.subr.mxu0 0.0
      %671 = vmatpush2.msra.mxu0 0.0
      %672 = vmatprep.subr.mxu0 0.0
      %673 = vmatpush2.msra.mxu0 0.0
      %674 = vmatprep.subr.mxu0 0.0
      %675 = vmatpush2.msra.mxu0 0.0
      %676 = vmatprep.subr.mxu0 0.0
      %677 = vmatpush2.msra.mxu0 0.0
      %678 = vmatprep.subr.mxu0 0.0
      %679 = vmatpush2.msra.mxu0 0.0
      %680 = vmatprep.subr.mxu0 0.0
      %681 = vmatpush2.msra.mxu0 0.0
      %682 = vmatprep.subr.mxu0 0.0
      %683 = vmatpush2.msra.mxu0 0.0
      %684 = vmatprep.subr.mxu0 0.0
      %685 = vmatpush2.msra.mxu0 0.0
      %686 = vmatprep.subr.mxu0 0.0
      %687 = vmatpush2.msra.mxu0 0.0
      %688 = vmatprep.subr.mxu0 0.0
      %689 = vmatpush2.msra.mxu0 0.0
      %690 = vmatprep.subr.mxu0 0.0
      %691 = vmatpush2.msra.mxu0 0.0
      %692 = vmatprep.subr.mxu0 0.0
      %693 = vmatpush2.msra.mxu0 0.0
      %694 = vmatprep.subr.mxu0 0.0
      %695 = vmatpush2.msra.mxu0 0.0
      %696 = vmatprep.subr.mxu0 0.0
      %697 = vmatpush2.msra.mxu0 0.0
      %698 = vmatprep.subr.mxu0 0.0
      %699 = vmatpush2.msra.mxu0 0.0
      %700 = vmatprep.mubr.f32.mxu0 0.0
      %701 = vmatmul.mubr.f32.gmra.mxu0 %v634
      %v702 = vpop.f32.mrf.mxu0
      %v703 = vadd.f32 0.0, %v702
      %v704 = vpop.f32.mrf.mxu0
      %705 = vdwg.mxu0
      %v707 = vsel %vm632, %v631, 0
      %709 = vmatprep.subr.mxu0 0.0
      %710 = vmatpush1.msra.mxu0 0.0
      %711 = vmatprep.subr.mxu0 0.0
      %712 = vmatpush1.msra.mxu0 0.0
      %713 = vmatprep.subr.mxu0 0.0
      %714 = vmatpush1.msra.mxu0 0.0
      %715 = vmatprep.subr.mxu0 0.0
      %716 = vmatpush1.msra.mxu0 0.0
      %717 = vmatprep.subr.mxu0 0.0
      %718 = vmatpush1.msra.mxu0 0.0
      %719 = vmatprep.subr.mxu0 0.0
      %720 = vmatpush1.msra.mxu0 0.0
      %721 = vmatprep.subr.mxu0 0.0
      %722 = vmatpush1.msra.mxu0 0.0
      %723 = vmatprep.subr.mxu0 0.0
      %724 = vmatpush1.msra.mxu0 0.0
      %725 = vmatprep.subr.mxu0 0.0
      %726 = vmatpush1.msra.mxu0 0.0
      %727 = vmatprep.subr.mxu0 0.0
      %728 = vmatpush1.msra.mxu0 0.0
      %729 = vmatprep.subr.mxu0 0.0
      %730 = vmatpush1.msra.mxu0 0.0
      %731 = vmatprep.subr.mxu0 0.0
      %732 = vmatpush1.msra.mxu0 0.0
      %733 = vmatprep.subr.mxu0 0.0
      %734 = vmatpush1.msra.mxu0 0.0
      %735 = vmatprep.subr.mxu0 0.0
      %736 = vmatpush1.msra.mxu0 0.0
      %737 = vmatprep.subr.mxu0 0.0
      %738 = vmatpush1.msra.mxu0 0.0
      %739 = vmatprep.subr.mxu0 0.0
      %740 = vmatpush1.msra.mxu0 %v439
      %741 = vmatprep.subr.mxu0 0.0
      %742 = vmatpush2.msra.mxu0 0.0
      %743 = vmatprep.subr.mxu0 0.0
      %744 = vmatpush2.msra.mxu0 0.0
      %745 = vmatprep.subr.mxu0 0.0
      %746 = vmatpush2.msra.mxu0 0.0
      %747 = vmatprep.subr.mxu0 0.0
      %748 = vmatpush2.msra.mxu0 0.0
      %749 = vmatprep.subr.mxu0 0.0
      %750 = vmatpush2.msra.mxu0 0.0
      %751 = vmatprep.subr.mxu0 0.0
      %752 = vmatpush2.msra.mxu0 0.0
      %753 = vmatprep.subr.mxu0 0.0
      %754 = vmatpush2.msra.mxu0 0.0
      %755 = vmatprep.subr.mxu0 0.0
      %756 = vmatpush2.msra.mxu0 0.0
      %757 = vmatprep.subr.mxu0 0.0
      %758 = vmatpush2.msra.mxu0 0.0
      %759 = vmatprep.subr.mxu0 0.0
      %760 = vmatpush2.msra.mxu0 0.0
      %761 = vmatprep.subr.mxu0 0.0
      %762 = vmatpush2.msra.mxu0 0.0
      %763 = vmatprep.subr.mxu0 0.0
      %764 = vmatpush2.msra.mxu0 0.0
      %765 = vmatprep.subr.mxu0 0.0
      %766 = vmatpush2.msra.mxu0 0.0
      %767 = vmatprep.subr.mxu0 0.0
      %768 = vmatpush2.msra.mxu0 0.0
      %769 = vmatprep.subr.mxu0 0.0
      %770 = vmatpush2.msra.mxu0 0.0
      %771 = vmatprep.subr.mxu0 0.0
      %772 = vmatpush2.msra.mxu0 0.0
      %773 = vmatprep.mubr.f32.mxu0 0.0
      %774 = vmatmul.mubr.f32.gmra.mxu0 %v707
      %v775 = vpop.f32.mrf.mxu0
      %v776 = vadd.f32 0.0, %v775
      %v777 = vpop.f32.mrf.mxu0
      %778 = vdwg.mxu0
      %v779 = vunpack.c.l.bf16 %v281
      %v780 = vunpack.c.l.bf16 %v283
      %v781 = vsel %vm317, %v376, 0.0
      %v782 = vrot.slane %v781, 4
      %v783 = vadd.f32 %v781, %v782
      %v784 = vrot.slane %v783, 2
      %v785 = vadd.f32 %v783, %v784
      %v786 = vrot.slane %v785, 1
      %v787 = vadd.f32 %v785, %v786
      %v788 = vmul.f32 %v787, %v447
      %v789 = vsel %vm317, %v435, 0.0
      %v790 = vrot.slane %v789, 4
      %v791 = vadd.f32 %v789, %v790
      %v792 = vrot.slane %v791, 2
      %v793 = vadd.f32 %v791, %v792
      %v794 = vrot.slane %v793, 1
      %v795 = vadd.f32 %v793, %v794
      %v796 = vmul.f32 %v795, %v447
      %v798 = vsel %vm317, %v788, 0
      %v801 = vsel %vm317, %v435, 0
      %803 = vmatprep.subr.mxu0 0.0
      %804 = vmatpush1.xpose.msra.mxu0 0.0
      %805 = vmatprep.subr.mxu0 0.0
      %806 = vmatpush1.xpose.msra.mxu0 0.0
      %807 = vmatprep.subr.mxu0 0.0
      %808 = vmatpush1.xpose.msra.mxu0 0.0
      %809 = vmatprep.subr.mxu0 0.0
      %810 = vmatpush1.xpose.msra.mxu0 0.0
      %811 = vmatprep.subr.mxu0 0.0
      %812 = vmatpush1.xpose.msra.mxu0 0.0
      %813 = vmatprep.subr.mxu0 0.0
      %814 = vmatpush1.xpose.msra.mxu0 0.0
      %815 = vmatprep.subr.mxu0 0.0
      %816 = vmatpush1.xpose.msra.mxu0 0.0
      %817 = vmatprep.subr.mxu0 0.0
      %818 = vmatpush1.xpose.msra.mxu0 0.0
      %819 = vmatprep.subr.mxu0 0.0
      %820 = vmatpush1.xpose.msra.mxu0 0.0
      %821 = vmatprep.subr.mxu0 0.0
      %822 = vmatpush1.xpose.msra.mxu0 0.0
      %823 = vmatprep.subr.mxu0 0.0
      %824 = vmatpush1.xpose.msra.mxu0 0.0
      %825 = vmatprep.subr.mxu0 0.0
      %826 = vmatpush1.xpose.msra.mxu0 0.0
      %827 = vmatprep.subr.mxu0 0.0
      %828 = vmatpush1.xpose.msra.mxu0 0.0
      %829 = vmatprep.subr.mxu0 0.0
      %830 = vmatpush1.xpose.msra.mxu0 0.0
      %831 = vmatprep.subr.mxu0 0.0
      %832 = vmatpush1.xpose.msra.mxu0 0.0
      %833 = vmatprep.subr.mxu0 0.0
      %834 = vmatpush1.xpose.msra.mxu0 %v801
      %835 = vmatprep.subr.mxu0 0.0
      %836 = vmatpush2.xpose.msra.mxu0 0.0
      %837 = vmatprep.subr.mxu0 0.0
      %838 = vmatpush2.xpose.msra.mxu0 0.0
      %839 = vmatprep.subr.mxu0 0.0
      %840 = vmatpush2.xpose.msra.mxu0 0.0
      %841 = vmatprep.subr.mxu0 0.0
      %842 = vmatpush2.xpose.msra.mxu0 0.0
      %843 = vmatprep.subr.mxu0 0.0
      %844 = vmatpush2.xpose.msra.mxu0 0.0
      %845 = vmatprep.subr.mxu0 0.0
      %846 = vmatpush2.xpose.msra.mxu0 0.0
      %847 = vmatprep.subr.mxu0 0.0
      %848 = vmatpush2.xpose.msra.mxu0 0.0
      %849 = vmatprep.subr.mxu0 0.0
      %850 = vmatpush2.xpose.msra.mxu0 0.0
      %851 = vmatprep.subr.mxu0 0.0
      %852 = vmatpush2.xpose.msra.mxu0 0.0
      %853 = vmatprep.subr.mxu0 0.0
      %854 = vmatpush2.xpose.msra.mxu0 0.0
      %855 = vmatprep.subr.mxu0 0.0
      %856 = vmatpush2.xpose.msra.mxu0 0.0
      %857 = vmatprep.subr.mxu0 0.0
      %858 = vmatpush2.xpose.msra.mxu0 0.0
      %859 = vmatprep.subr.mxu0 0.0
      %860 = vmatpush2.xpose.msra.mxu0 0.0
      %861 = vmatprep.subr.mxu0 0.0
      %862 = vmatpush2.xpose.msra.mxu0 0.0
      %863 = vmatprep.subr.mxu0 0.0
      %864 = vmatpush2.xpose.msra.mxu0 0.0
      %865 = vmatprep.subr.mxu0 0.0
      %866 = vmatpush2.xpose.msra.mxu0 0.0
      %867 = vmatprep.mubr.f32.mxu0 0.0
      %868 = vmatmul.mubr.f32.gmra.mxu0 %v798
      %v869 = vpop.f32.mrf.mxu0
      %v870 = vadd.f32 0.0, %v869
      %v871 = vpop.f32.mrf.mxu0
      %872 = vdwg.mxu0
      %v874 = vsel %vm317, %v796, 0
      %v877 = vsel %vm317, %v376, 0
      %879 = vmatprep.subr.mxu0 0.0
      %880 = vmatpush1.xpose.msra.mxu0 0.0
      %881 = vmatprep.subr.mxu0 0.0
      %882 = vmatpush1.xpose.msra.mxu0 0.0
      %883 = vmatprep.subr.mxu0 0.0
      %884 = vmatpush1.xpose.msra.mxu0 0.0
      %885 = vmatprep.subr.mxu0 0.0
      %886 = vmatpush1.xpose.msra.mxu0 0.0
      %887 = vmatprep.subr.mxu0 0.0
      %888 = vmatpush1.xpose.msra.mxu0 0.0
      %889 = vmatprep.subr.mxu0 0.0
      %890 = vmatpush1.xpose.msra.mxu0 0.0
      %891 = vmatprep.subr.mxu0 0.0
      %892 = vmatpush1.xpose.msra.mxu0 0.0
      %893 = vmatprep.subr.mxu0 0.0
      %894 = vmatpush1.xpose.msra.mxu0 0.0
      %895 = vmatprep.subr.mxu0 0.0
      %896 = vmatpush1.xpose.msra.mxu0 0.0
      %897 = vmatprep.subr.mxu0 0.0
      %898 = vmatpush1.xpose.msra.mxu0 0.0
      %899 = vmatprep.subr.mxu0 0.0
      %900 = vmatpush1.xpose.msra.mxu0 0.0
      %901 = vmatprep.subr.mxu0 0.0
      %902 = vmatpush1.xpose.msra.mxu0 0.0
      %903 = vmatprep.subr.mxu0 0.0
      %904 = vmatpush1.xpose.msra.mxu0 0.0
      %905 = vmatprep.subr.mxu0 0.0
      %906 = vmatpush1.xpose.msra.mxu0 0.0
      %907 = vmatprep.subr.mxu0 0.0
      %908 = vmatpush1.xpose.msra.mxu0 0.0
      %909 = vmatprep.subr.mxu0 0.0
      %910 = vmatpush1.xpose.msra.mxu0 %v877
      %911 = vmatprep.subr.mxu0 0.0
      %912 = vmatpush2.xpose.msra.mxu0 0.0
      %913 = vmatprep.subr.mxu0 0.0
      %914 = vmatpush2.xpose.msra.mxu0 0.0
      %915 = vmatprep.subr.mxu0 0.0
      %916 = vmatpush2.xpose.msra.mxu0 0.0
      %917 = vmatprep.subr.mxu0 0.0
      %918 = vmatpush2.xpose.msra.mxu0 0.0
      %919 = vmatprep.subr.mxu0 0.0
      %920 = vmatpush2.xpose.msra.mxu0 0.0
      %921 = vmatprep.subr.mxu0 0.0
      %922 = vmatpush2.xpose.msra.mxu0 0.0
      %923 = vmatprep.subr.mxu0 0.0
      %924 = vmatpush2.xpose.msra.mxu0 0.0
      %925 = vmatprep.subr.mxu0 0.0
      %926 = vmatpush2.xpose.msra.mxu0 0.0
      %927 = vmatprep.subr.mxu0 0.0
      %928 = vmatpush2.xpose.msra.mxu0 0.0
      %929 = vmatprep.subr.mxu0 0.0
      %930 = vmatpush2.xpose.msra.mxu0 0.0
      %931 = vmatprep.subr.mxu0 0.0
      %932 = vmatpush2.xpose.msra.mxu0 0.0
      %933 = vmatprep.subr.mxu0 0.0
      %934 = vmatpush2.xpose.msra.mxu0 0.0
      %935 = vmatprep.subr.mxu0 0.0
      %936 = vmatpush2.xpose.msra.mxu0 0.0
      %937 = vmatprep.subr.mxu0 0.0
      %938 = vmatpush2.xpose.msra.mxu0 0.0
      %939 = vmatprep.subr.mxu0 0.0
      %940 = vmatpush2.xpose.msra.mxu0 0.0
      %941 = vmatprep.subr.mxu0 0.0
      %942 = vmatpush2.xpose.msra.mxu0 0.0
      %943 = vmatprep.mubr.f32.mxu0 0.0
      %944 = vmatmul.mubr.f32.gmra.mxu0 %v874
      %v945 = vpop.f32.mrf.mxu0
      %v946 = vadd.f32 0.0, %v945
      %v947 = vpop.f32.mrf.mxu0
      %948 = vdwg.mxu0
      %v949 = vsel %vm609, %v870, -inf
      %950 = vmax.xlane.f32.xlu0 %v949
      %v951 = vpop.xlane.xlu0 %950
      %v952 = vsub.f32 %v870, %v951
      %v953 = vmul.f32 %v952, 1.442695
      %v954 = vpow.pop %v953
      %v955 = vsel %vm609, %v954, 0.0
      %956 = vadd.xlane.f32.xlu0 %v955
      %v957 = vpop.xlane.xlu0 %956
      %v958 = vrcp.pop %v957
      %v959 = vmul.f32 %v954, %v958
      %v960 = vsel %vm609, %v946, -inf
      %961 = vmax.xlane.f32.xlu0 %v960
      %v962 = vpop.xlane.xlu0 %961
      %v963 = vsub.f32 %v946, %v962
      %v964 = vmul.f32 %v963, 1.442695
      %v965 = vpow.pop %v964
      %v966 = vsel %vm609, %v965, 0.0
      %967 = vadd.xlane.f32.xlu0 %v966
      %v968 = vpop.xlane.xlu0 %967
      %v969 = vrcp.pop %v968
      %v970 = vmul.f32 %v965, %v969
      %v972 = vsel %vm632, %v959, 0
      %974 = vmatprep.subr.mxu0 0.0
      %975 = vmatpush1.msra.mxu0 0.0
      %976 = vmatprep.subr.mxu0 0.0
      %977 = vmatpush1.msra.mxu0 0.0
      %978 = vmatprep.subr.mxu0 0.0
      %979 = vmatpush1.msra.mxu0 0.0
      %980 = vmatprep.subr.mxu0 0.0
      %981 = vmatpush1.msra.mxu0 0.0
      %982 = vmatprep.subr.mxu0 0.0
      %983 = vmatpush1.msra.mxu0 0.0
      %984 = vmatprep.subr.mxu0 0.0
      %985 = vmatpush1.msra.mxu0 0.0
      %986 = vmatprep.subr.mxu0 0.0
      %987 = vmatpush1.msra.mxu0 0.0
      %988 = vmatprep.subr.mxu0 0.0
      %989 = vmatpush1.msra.mxu0 0.0
      %990 = vmatprep.subr.mxu0 0.0
      %991 = vmatpush1.msra.mxu0 0.0
      %992 = vmatprep.subr.mxu0 0.0
      %993 = vmatpush1.msra.mxu0 0.0
      %994 = vmatprep.subr.mxu0 0.0
      %995 = vmatpush1.msra.mxu0 0.0
      %996 = vmatprep.subr.mxu0 0.0
      %997 = vmatpush1.msra.mxu0 0.0
      %998 = vmatprep.subr.mxu0 0.0
      %999 = vmatpush1.msra.mxu0 0.0
      %1000 = vmatprep.subr.mxu0 0.0
      %1001 = vmatpush1.msra.mxu0 0.0
      %1002 = vmatprep.subr.mxu0 0.0
      %1003 = vmatpush1.msra.mxu0 0.0
      %1004 = vmatprep.subr.mxu0 0.0
      %1005 = vmatpush1.msra.mxu0 %v779
      %1006 = vmatprep.subr.mxu0 0.0
      %1007 = vmatpush2.msra.mxu0 0.0
      %1008 = vmatprep.subr.mxu0 0.0
      %1009 = vmatpush2.msra.mxu0 0.0
      %1010 = vmatprep.subr.mxu0 0.0
      %1011 = vmatpush2.msra.mxu0 0.0
      %1012 = vmatprep.subr.mxu0 0.0
      %1013 = vmatpush2.msra.mxu0 0.0
      %1014 = vmatprep.subr.mxu0 0.0
      %1015 = vmatpush2.msra.mxu0 0.0
      %1016 = vmatprep.subr.mxu0 0.0
      %1017 = vmatpush2.msra.mxu0 0.0
      %1018 = vmatprep.subr.mxu0 0.0
      %1019 = vmatpush2.msra.mxu0 0.0
      %1020 = vmatprep.subr.mxu0 0.0
      %1021 = vmatpush2.msra.mxu0 0.0
      %1022 = vmatprep.subr.mxu0 0.0
      %1023 = vmatpush2.msra.mxu0 0.0
      %1024 = vmatprep.subr.mxu0 0.0
      %1025 = vmatpush2.msra.mxu0 0.0
      %1026 = vmatprep.subr.mxu0 0.0
      %1027 = vmatpush2.msra.mxu0 0.0
      %1028 = vmatprep.subr.mxu0 0.0
      %1029 = vmatpush2.msra.mxu0 0.0
      %1030 = vmatprep.subr.mxu0 0.0
      %1031 = vmatpush2.msra.mxu0 0.0
      %1032 = vmatprep.subr.mxu0 0.0
      %1033 = vmatpush2.msra.mxu0 0.0
      %1034 = vmatprep.subr.mxu0 0.0
      %1035 = vmatpush2.msra.mxu0 0.0
      %1036 = vmatprep.subr.mxu0 0.0
      %1037 = vmatpush2.msra.mxu0 0.0
      %1038 = vmatprep.mubr.f32.mxu0 0.0
      %1039 = vmatmul.mubr.f32.gmra.mxu0 %v972
      %v1040 = vpop.f32.mrf.mxu0
      %v1041 = vadd.f32 0.0, %v1040
      %v1042 = vpop.f32.mrf.mxu0
      %1043 = vdwg.mxu0
      %v1045 = vsel %vm632, %v970, 0
      %1047 = vmatprep.subr.mxu0 0.0
      %1048 = vmatpush1.msra.mxu0 0.0
      %1049 = vmatprep.subr.mxu0 0.0
      %1050 = vmatpush1.msra.mxu0 0.0
      %1051 = vmatprep.subr.mxu0 0.0
      %1052 = vmatpush1.msra.mxu0 0.0
      %1053 = vmatprep.subr.mxu0 0.0
      %1054 = vmatpush1.msra.mxu0 0.0
      %1055 = vmatprep.subr.mxu0 0.0
      %1056 = vmatpush1.msra.mxu0 0.0
      %1057 = vmatprep.subr.mxu0 0.0
      %1058 = vmatpush1.msra.mxu0 0.0
      %1059 = vmatprep.subr.mxu0 0.0
      %1060 = vmatpush1.msra.mxu0 0.0
      %1061 = vmatprep.subr.mxu0 0.0
      %1062 = vmatpush1.msra.mxu0 0.0
      %1063 = vmatprep.subr.mxu0 0.0
      %1064 = vmatpush1.msra.mxu0 0.0
      %1065 = vmatprep.subr.mxu0 0.0
      %1066 = vmatpush1.msra.mxu0 0.0
      %1067 = vmatprep.subr.mxu0 0.0
      %1068 = vmatpush1.msra.mxu0 0.0
      %1069 = vmatprep.subr.mxu0 0.0
      %1070 = vmatpush1.msra.mxu0 0.0
      %1071 = vmatprep.subr.mxu0 0.0
      %1072 = vmatpush1.msra.mxu0 0.0
      %1073 = vmatprep.subr.mxu0 0.0
      %1074 = vmatpush1.msra.mxu0 0.0
      %1075 = vmatprep.subr.mxu0 0.0
      %1076 = vmatpush1.msra.mxu0 0.0
      %1077 = vmatprep.subr.mxu0 0.0
      %1078 = vmatpush1.msra.mxu0 %v780
      %1079 = vmatprep.subr.mxu0 0.0
      %1080 = vmatpush2.msra.mxu0 0.0
      %1081 = vmatprep.subr.mxu0 0.0
      %1082 = vmatpush2.msra.mxu0 0.0
      %1083 = vmatprep.subr.mxu0 0.0
      %1084 = vmatpush2.msra.mxu0 0.0
      %1085 = vmatprep.subr.mxu0 0.0
      %1086 = vmatpush2.msra.mxu0 0.0
      %1087 = vmatprep.subr.mxu0 0.0
      %1088 = vmatpush2.msra.mxu0 0.0
      %1089 = vmatprep.subr.mxu0 0.0
      %1090 = vmatpush2.msra.mxu0 0.0
      %1091 = vmatprep.subr.mxu0 0.0
      %1092 = vmatpush2.msra.mxu0 0.0
      %1093 = vmatprep.subr.mxu0 0.0
      %1094 = vmatpush2.msra.mxu0 0.0
      %1095 = vmatprep.subr.mxu0 0.0
      %1096 = vmatpush2.msra.mxu0 0.0
      %1097 = vmatprep.subr.mxu0 0.0
      %1098 = vmatpush2.msra.mxu0 0.0
      %1099 = vmatprep.subr.mxu0 0.0
      %1100 = vmatpush2.msra.mxu0 0.0
      %1101 = vmatprep.subr.mxu0 0.0
      %1102 = vmatpush2.msra.mxu0 0.0
      %1103 = vmatprep.subr.mxu0 0.0
      %1104 = vmatpush2.msra.mxu0 0.0
      %1105 = vmatprep.subr.mxu0 0.0
      %1106 = vmatpush2.msra.mxu0 0.0
      %1107 = vmatprep.subr.mxu0 0.0
      %1108 = vmatpush2.msra.mxu0 0.0
      %1109 = vmatprep.subr.mxu0 0.0
      %1110 = vmatpush2.msra.mxu0 0.0
      %1111 = vmatprep.mubr.f32.mxu0 0.0
      %1112 = vmatmul.mubr.f32.gmra.mxu0 %v1045
      %v1113 = vpop.f32.mrf.mxu0
      %v1114 = vadd.f32 0.0, %v1113
      %v1115 = vpop.f32.mrf.mxu0
      %1116 = vdwg.mxu0
      %1118 = vrot.lane.b32.xlu0 %v1041, 32
      %v1119 = vpop.permute.xlu0 %1118
      %1122 = vrot.lane.b32.xlu0 %v776, 64
      %v1123 = vpop.permute.xlu0 %1122
      %1126 = vrot.lane.b32.xlu0 %v1114, 96
      %v1127 = vpop.permute.xlu0 %1126
      %v1129 = vsel %vm317, %v703, %v1119
      %vm1130 = vcmask 523264
      %v1131 = vsel %vm1130, %v1129, %v1123
      %vm1132 = vcmask 785408
      %v1133 = vsel %vm1132, %v1131, %v1127
      %v1134 = vld [vmem:[%s5] sm:$0x1]
      %v1135 = vmul.f32 %v1133, %v1134
      %vm1136 = vcmask 1040384
      %v1137 = vsel %vm1136, %v1135, 0.0
      %1138 = vadd.xlane.f32.xlu0 %v1137
      %v1139 = vpop.xlane.xlu0 %1138
      %v1140 = vld [vmem:[#allocation2] sm:$0x1]
      %v1141 = vadd.f32 %v1139, %v1140
      %v1142 = vld [vmem:[%s4] sm:$0xff]
      %v1143 = vld [vmem:[%s4 + $0x8] sm:$0xff]
      %v1144 = vld [vmem:[%s4 + $0x10] sm:$0xff]
      %v1145 = vld [vmem:[%s4 + $0x18] sm:$0xff]
      %v1146 = vld [vmem:[%s4 + $0x20] sm:$0xff]
      %v1147 = vld [vmem:[%s4 + $0x28] sm:$0xff]
      %v1148 = vld [vmem:[%s4 + $0x30] sm:$0xff]
      %v1149 = vld [vmem:[%s4 + $0x38] sm:$0xff]
      %v1150 = vld [vmem:[%s4 + $0x40] sm:$0xff]
      %v1151 = vld [vmem:[%s4 + $0x48] sm:$0xff]
      %v1152 = vld [vmem:[%s4 + $0x50] sm:$0xff]
      %v1153 = vld [vmem:[%s4 + $0x58] sm:$0xff]
      %v1154 = vld [vmem:[%s4 + $0x60] sm:$0xff]
      %v1155 = vld [vmem:[%s4 + $0x68] sm:$0xff]
      %v1156 = vld [vmem:[%s4 + $0x70] sm:$0xff]
      %v1157 = vld [vmem:[%s4 + $0x78] sm:$0xff]
      %1158 = vmatprep.subr.mxu0 0.0
      %1159 = vmatpush1.msra.mxu0 %v1157
      %1160 = vmatprep.subr.mxu0 0.0
      %1161 = vmatpush1.msra.mxu0 %v1156
      %1162 = vmatprep.subr.mxu0 0.0
      %1163 = vmatpush1.msra.mxu0 %v1155
      %1164 = vmatprep.subr.mxu0 0.0
      %1165 = vmatpush1.msra.mxu0 %v1154
      %1166 = vmatprep.subr.mxu0 0.0
      %1167 = vmatpush1.msra.mxu0 %v1153
      %1168 = vmatprep.subr.mxu0 0.0
      %1169 = vmatpush1.msra.mxu0 %v1152
      %1170 = vmatprep.subr.mxu0 0.0
      %1171 = vmatpush1.msra.mxu0 %v1151
      %1172 = vmatprep.subr.mxu0 0.0
      %1173 = vmatpush1.msra.mxu0 %v1150
      %1174 = vmatprep.subr.mxu0 0.0
      %1175 = vmatpush1.msra.mxu0 %v1149
      %1176 = vmatprep.subr.mxu0 0.0
      %1177 = vmatpush1.msra.mxu0 %v1148
      %1178 = vmatprep.subr.mxu0 0.0
      %1179 = vmatpush1.msra.mxu0 %v1147
      %1180 = vmatprep.subr.mxu0 0.0
      %1181 = vmatpush1.msra.mxu0 %v1146
      %1182 = vmatprep.subr.mxu0 0.0
      %1183 = vmatpush1.msra.mxu0 %v1145
      %1184 = vmatprep.subr.mxu0 0.0
      %1185 = vmatpush1.msra.mxu0 %v1144
      %1186 = vmatprep.subr.mxu0 0.0
      %1187 = vmatpush1.msra.mxu0 %v1143
      %1188 = vmatprep.subr.mxu0 0.0
      %1189 = vmatpush1.msra.mxu0 %v1142
      %1190 = vmatprep.subr.mxu0 0.0
      %1191 = vmatpush2.msra.mxu0 0.0
      %1192 = vmatprep.subr.mxu0 0.0
      %1193 = vmatpush2.msra.mxu0 0.0
      %1194 = vmatprep.subr.mxu0 0.0
      %1195 = vmatpush2.msra.mxu0 0.0
      %1196 = vmatprep.subr.mxu0 0.0
      %1197 = vmatpush2.msra.mxu0 0.0
      %1198 = vmatprep.subr.mxu0 0.0
      %1199 = vmatpush2.msra.mxu0 0.0
      %1200 = vmatprep.subr.mxu0 0.0
      %1201 = vmatpush2.msra.mxu0 0.0
      %1202 = vmatprep.subr.mxu0 0.0
      %1203 = vmatpush2.msra.mxu0 0.0
      %1204 = vmatprep.subr.mxu0 0.0
      %1205 = vmatpush2.msra.mxu0 0.0
      %1206 = vmatprep.subr.mxu0 0.0
      %1207 = vmatpush2.msra.mxu0 0.0
      %1208 = vmatprep.subr.mxu0 0.0
      %1209 = vmatpush2.msra.mxu0 0.0
      %1210 = vmatprep.subr.mxu0 0.0
      %1211 = vmatpush2.msra.mxu0 0.0
      %1212 = vmatprep.subr.mxu0 0.0
      %1213 = vmatpush2.msra.mxu0 0.0
      %1214 = vmatprep.subr.mxu0 0.0
      %1215 = vmatpush2.msra.mxu0 0.0
      %1216 = vmatprep.subr.mxu0 0.0
      %1217 = vmatpush2.msra.mxu0 0.0
      %1218 = vmatprep.subr.mxu0 0.0
      %1219 = vmatpush2.msra.mxu0 0.0
      %1220 = vmatprep.subr.mxu0 0.0
      %1221 = vmatpush2.msra.mxu0 0.0
      %1222 = vmatprep.mubr.f32.mxu0 0.0
      %1223 = vmatmul.mubr.f32.gmra.mxu0 %v1133
      %v1224 = vpop.f32.mrf.mxu0
      %v1225 = vadd.f32 0.0, %v1224
      %v1226 = vpop.f32.mrf.mxu0
      %1227 = vdwg.mxu0
      %v1228 = vmul.f32 %v1133, %v1133
      %v1229 = vmul.f32 %v1142, %v1142
      %v1230 = vmul.f32 %v1143, %v1143
      %v1231 = vmul.f32 %v1144, %v1144
      %v1232 = vmul.f32 %v1145, %v1145
      %v1233 = vmul.f32 %v1146, %v1146
      %v1234 = vmul.f32 %v1147, %v1147
      %v1235 = vmul.f32 %v1148, %v1148
      %v1236 = vmul.f32 %v1149, %v1149
      %v1237 = vmul.f32 %v1150, %v1150
      %v1238 = vmul.f32 %v1151, %v1151
      %v1239 = vmul.f32 %v1152, %v1152
      %v1240 = vmul.f32 %v1153, %v1153
      %v1241 = vmul.f32 %v1154, %v1154
      %v1242 = vmul.f32 %v1155, %v1155
      %v1243 = vmul.f32 %v1156, %v1156
      %v1244 = vmul.f32 %v1157, %v1157
      %1245 = vmatprep.subr.mxu0 0.0
      %1246 = vmatpush1.msra.mxu0 %v1244
      %1247 = vmatprep.subr.mxu0 0.0
      %1248 = vmatpush1.msra.mxu0 %v1243
      %1249 = vmatprep.subr.mxu0 0.0
      %1250 = vmatpush1.msra.mxu0 %v1242
      %1251 = vmatprep.subr.mxu0 0.0
      %1252 = vmatpush1.msra.mxu0 %v1241
      %1253 = vmatprep.subr.mxu0 0.0
      %1254 = vmatpush1.msra.mxu0 %v1240
      %1255 = vmatprep.subr.mxu0 0.0
      %1256 = vmatpush1.msra.mxu0 %v1239
      %1257 = vmatprep.subr.mxu0 0.0
      %1258 = vmatpush1.msra.mxu0 %v1238
      %1259 = vmatprep.subr.mxu0 0.0
      %1260 = vmatpush1.msra.mxu0 %v1237
      %1261 = vmatprep.subr.mxu0 0.0
      %1262 = vmatpush1.msra.mxu0 %v1236
      %1263 = vmatprep.subr.mxu0 0.0
      %1264 = vmatpush1.msra.mxu0 %v1235
      %1265 = vmatprep.subr.mxu0 0.0
      %1266 = vmatpush1.msra.mxu0 %v1234
      %1267 = vmatprep.subr.mxu0 0.0
      %1268 = vmatpush1.msra.mxu0 %v1233
      %1269 = vmatprep.subr.mxu0 0.0
      %1270 = vmatpush1.msra.mxu0 %v1232
      %1271 = vmatprep.subr.mxu0 0.0
      %1272 = vmatpush1.msra.mxu0 %v1231
      %1273 = vmatprep.subr.mxu0 0.0
      %1274 = vmatpush1.msra.mxu0 %v1230
      %1275 = vmatprep.subr.mxu0 0.0
      %1276 = vmatpush1.msra.mxu0 %v1229
      %1277 = vmatprep.subr.mxu0 0.0
      %1278 = vmatpush2.msra.mxu0 0.0
      %1279 = vmatprep.subr.mxu0 0.0
      %1280 = vmatpush2.msra.mxu0 0.0
      %1281 = vmatprep.subr.mxu0 0.0
      %1282 = vmatpush2.msra.mxu0 0.0
      %1283 = vmatprep.subr.mxu0 0.0
      %1284 = vmatpush2.msra.mxu0 0.0
      %1285 = vmatprep.subr.mxu0 0.0
      %1286 = vmatpush2.msra.mxu0 0.0
      %1287 = vmatprep.subr.mxu0 0.0
      %1288 = vmatpush2.msra.mxu0 0.0
      %1289 = vmatprep.subr.mxu0 0.0
      %1290 = vmatpush2.msra.mxu0 0.0
      %1291 = vmatprep.subr.mxu0 0.0
      %1292 = vmatpush2.msra.mxu0 0.0
      %1293 = vmatprep.subr.mxu0 0.0
      %1294 = vmatpush2.msra.mxu0 0.0
      %1295 = vmatprep.subr.mxu0 0.0
      %1296 = vmatpush2.msra.mxu0 0.0
      %1297 = vmatprep.subr.mxu0 0.0
      %1298 = vmatpush2.msra.mxu0 0.0
      %1299 = vmatprep.subr.mxu0 0.0
      %1300 = vmatpush2.msra.mxu0 0.0
      %1301 = vmatprep.subr.mxu0 0.0
      %1302 = vmatpush2.msra.mxu0 0.0
      %1303 = vmatprep.subr.mxu0 0.0
      %1304 = vmatpush2.msra.mxu0 0.0
      %1305 = vmatprep.subr.mxu0 0.0
      %1306 = vmatpush2.msra.mxu0 0.0
      %1307 = vmatprep.subr.mxu0 0.0
      %1308 = vmatpush2.msra.mxu0 0.0
      %1309 = vmatprep.mubr.f32.mxu0 0.0
      %1310 = vmatmul.mubr.f32.gmra.mxu0 %v1228
      %v1311 = vpop.f32.mrf.mxu0
      %v1312 = vadd.f32 0.0, %v1311
      %v1313 = vpop.f32.mrf.mxu0
      %1314 = vdwg.mxu0
      %v1315 = vmul.f32 %v1225, %v1225
      %v1316 = vsub.f32 %v1315, %v1312
      %v1317 = vsel %vm609, %v1316, 0.0
      %1318 = vadd.xlane.f32.xlu0 %v1317
      %v1319 = vpop.xlane.xlu0 %1318
      %v1320 = vmul.f32 %v1319, 0.5
      %v1321 = vadd.f32 %v1141, %v1320
      %s1323 = vtos %v1321
      %v1324 = vstv %s1323
      %1326 = vst [vmem:[%s278] sm:$0xff] %v1324
      %p1327 = scmp.lt.s32.totalorder %s20, 1
      %s1328 = scalar_select %p1327, %s20, 1
      %s1329 = smul.addr %s1328, 8
      %s1330 = scalar_lea.vmem %s7, %s1329
      // Predicated region
      $region49: #{mpcn_forward.3} parent=47 // pred_check
        %p1331 = pneg %p190
      $region50: #{mpcn_forward.3} parent=47 // pred_check_branch
        %1333 = sbr.rel (%p1331) target = $region52
      $region51: #{mpcn_forward.3} parent=47 // pred_region
        _
      $region52: #{mpcn_forward.3} parent=47 // pred_fallthru
        _
    $region48: #{mpcn_forward.3} parent=5 // pred_fallthru
      _
    %p1334 = scmp.le.s32.totalorder 2, %s15
    // Predicated region
    $region53: #{mpcn_forward.3} parent=5 // pred_check
      %p1335 = pneg %p1334
    $region54: #{mpcn_forward.3} parent=5 // pred_check_branch
      %1337 = sbr.rel (%p1335) target = $region56
    $region55: #{mpcn_forward.3} parent=5 // pred_region
      %s1338 = ssub.s32 %s15, 2
      // Predicated region
      $region57: #{mpcn_forward.3} parent=55 // pred_check
        %p1339 = pneg %p196
      $region58: #{mpcn_forward.3} parent=55 // pred_check_branch
        %1341 = sbr.rel (%p1339) target = $region60
      $region59: #{mpcn_forward.3} parent=55 // pred_region
        %p1342 = scmp.lt.s32.totalorder %s21, 1
        %s1343 = scalar_select %p1342, %s21, 1
        %s1344 = smul.addr %s1343, 8
        %s1345 = scalar_lea.vmem %s7, %s1344
      $region60: #{mpcn_forward.3} parent=55 // pred_fallthru
        _
    $region56: #{mpcn_forward.3} parent=5 // pred_fallthru
      _
  $region6: #{mpcn_forward.3} parent=0 // loop_footer
    %s19 = sadd.s32 1, %s15
  $region7: #{mpcn_forward.3} parent=0 // loop_footer_branch
    %14 = sbr.rel target = $region3
  $region8: #{mpcn_forward.3} parent=0 // loop_exit
    _

</llo_original>
